<compile_context>
chip_gen: v7x
topology: tpu7x:2x2x1
jax: 0.10.0
libtpu: 0.0.40
codegen_flags: <defaults>
</compile_context>

<pallas_src>
import jax
import jax.numpy as jnp
from jax import lax
from jax.experimental import pallas as pl
from jax.experimental.pallas import tpu as pltpu

# ----------------------------- configuration --------------------------------
B = 8            # batch
E = 128          # embedding size (module default 512, scaled down)
H = 256          # classifier hidden width
NUM_ID = 128     # number of identity classes (module default 1035, scaled down)
NUM_AGE = 3
NUM_GENDER = 2
PADW = 128       # lane-dense padded width for the small classifier heads / output

COSFACE_S = 64.0
COSFACE_M = 0.35
BN_EPS = 1e-5
NEG_BIG = -1e30

# ---- layout of the single f32 constant slab (all offsets are multiples of 128)
OFF_FRFM_B = 0                      # (1, 2E)   FRFM bias [age | gender]
OFF_B1     = OFF_FRFM_B + 2 * E     # (1, 2H)   head layer-1 bias [age | gender]
OFF_GAMMA  = OFF_B1 + 2 * H         # (1, 2H)   BN gamma [age | gender]
OFF_BETA   = OFF_GAMMA + 2 * H      # (1, 2H)   BN beta  [age | gender]
OFF_B2     = OFF_BETA + 2 * H       # (1, 2*PADW) head layer-2 bias (padded)
OFF_WINV   = OFF_B2 + 2 * PADW      # (1, NUM_ID) CosFace 1/||w_col||
OFF_BCCM   = OFF_WINV + NUM_ID      # (1, 3E)   BCCM predictor rows [id|age|gender]
CONSTS_K   = OFF_BCCM + 3 * E       # total = 2560

_VMEM = pl.BlockSpec(memory_space=pltpu.MemorySpace.VMEM)


# --------------------------- in-kernel helpers -------------------------------
def _softmax_ce_and_acc(raw_logits, onehot, valid_mask):
    """Cross entropy (mean over batch) and argmax accuracy, both (1,1) f32."""
    if valid_mask is not None:
        masked = jnp.where(valid_mask, raw_logits, NEG_BIG)
    else:
        masked = raw_logits
    row_max = jnp.max(masked, axis=-1, keepdims=True)                       # (B,1)
    logz = jnp.log(jnp.sum(jnp.exp(masked - row_max), axis=-1, keepdims=True)) + row_max
    picked = jnp.sum(raw_logits * onehot, axis=-1, keepdims=True)           # (B,1)
    loss = jnp.sum(logz - picked, axis=0, keepdims=True) * (1.0 / B)        # (1,1)
    # ties count as correct (torch argmax would pick the first index)
    correct = (picked >= row_max).astype(jnp.float32)
    acc = jnp.sum(correct, axis=0, keepdims=True) * (1.0 / B)               # (1,1)
    return loss, acc


# ------------------------------ fused kernel ---------------------------------
def _fused_kernel(x_ref, lab_ref, we_ref, w1_ref, w2_ref, c_ref, out_ref):
    x = x_ref[...]                                   # (B, E) f32
    x_bf = x.astype(jnp.bfloat16)                    # cast once, reused
    lab = lab_ref[...]                               # (B, 3) int32

    # one iota reused for every one-hot / mask / output pack (NUM_ID == PADW)
    cols = lax.broadcasted_iota(jnp.int32, (B, PADW), 1)

    # ---------------- FRFM: one fused [Wa | Wg] matmul -----------------------
    # ag == [age_emb | gen_emb] after the ReLU, so it is also the fused
    # classifier-head LHS with no extra concatenation.
    ag = jnp.dot(x_bf, we_ref[:, :2 * E], preferred_element_type=jnp.float32)
    ag = jnp.maximum(ag + c_ref[:, OFF_FRFM_B:OFF_FRFM_B + 2 * E], 0.0)      # (B, 2E)
    age_emb = ag[:, :E]
    gen_emb = ag[:, E:]
    id_emb = x - age_emb - gen_emb

    # ---------------- CosFace identity head (norms hoisted to wrapper) -------
    inv_xn = lax.rsqrt(jnp.maximum(
        jnp.sum(id_emb * id_emb, axis=-1, keepdims=True), 1e-24))           # (B,1)
    cos_raw = jnp.dot(id_emb.astype(jnp.bfloat16), we_ref[:, 2 * E:],
                      preferred_element_type=jnp.float32)                    # (B, NUM_ID)
    cos = cos_raw * inv_xn * c_ref[:, OFF_WINV:OFF_WINV + NUM_ID]

    id_onehot = (cols == lab[:, 0:1]).astype(jnp.float32)
    id_logits = COSFACE_S * (cos - COSFACE_M * id_onehot)
    id_loss, id_acc = _softmax_ce_and_acc(id_logits, id_onehot, None)

    # ---------------- fused age + gender classifier (block-diag weights) -----
    h = jnp.dot(ag.astype(jnp.bfloat16), w1_ref[...],
                preferred_element_type=jnp.float32) + c_ref[:, OFF_B1:OFF_B1 + 2 * H]
    mean = jnp.mean(h, axis=0, keepdims=True)
    var = jnp.mean((h - mean) ** 2, axis=0, keepdims=True)    # biased, BN training mode
    hn = (h - mean) * lax.rsqrt(var + BN_EPS)
    hn = hn * c_ref[:, OFF_GAMMA:OFF_GAMMA + 2 * H] + c_ref[:, OFF_BETA:OFF_BETA + 2 * H]
    hn = jnp.maximum(hn, 0.0)
    logits2 = jnp.dot(hn.astype(jnp.bfloat16), w2_ref[...],
                      preferred_element_type=jnp.float32) + c_ref[:, OFF_B2:OFF_B2 + 2 * PADW]
    age_logits = logits2[:, :PADW]
    gen_logits = logits2[:, PADW:]

    age_onehot = (cols == lab[:, 1:2]).astype(jnp.float32)
    age_loss, age_acc = _softmax_ce_and_acc(age_logits, age_onehot, cols < NUM_AGE)
    gen_onehot = (cols == lab[:, 2:3]).astype(jnp.float32)
    gen_loss, gen_acc = _softmax_ce_and_acc(gen_logits, gen_onehot, cols < NUM_GENDER)

    # ---------------- BCCM canonical correlation ------------------------------
    wb_id = c_ref[:, OFF_BCCM:OFF_BCCM + E]
    wb_age = c_ref[:, OFF_BCCM + E:OFF_BCCM + 2 * E]
    wb_gen = c_ref[:, OFF_BCCM + 2 * E:OFF_BCCM + 3 * E]
    id_p = jnp.sum(id_emb * wb_id, axis=-1, keepdims=True)                  # (B, 1)
    age_p = jnp.sum(age_emb * wb_age, axis=-1, keepdims=True)
    gen_p = jnp.sum(gen_emb * wb_gen, axis=-1, keepdims=True)

    id_m = jnp.mean(id_p, axis=0, keepdims=True)
    age_m = jnp.mean(age_p, axis=0, keepdims=True)
    gen_m = jnp.mean(gen_p, axis=0, keepdims=True)
    # torch .var(dim=0) is unbiased (/(n-1)); cross terms use .mean (/n), as in the spec.
    id_v = jnp.sum((id_p - id_m) ** 2, axis=0, keepdims=True) / (B - 1) + 1e-6
    age_v = jnp.sum((age_p - age_m) ** 2, axis=0, keepdims=True) / (B - 1) + 1e-6
    gen_v = jnp.sum((gen_p - gen_m) ** 2, axis=0, keepdims=True) / (B - 1) + 1e-6

    id_age = jnp.mean((age_p - age_m) * (id_p - id_m), axis=0, keepdims=True) ** 2 / (age_v * id_v)
    id_gen = jnp.mean((gen_p - gen_m) * (id_p - id_m), axis=0, keepdims=True) ** 2 / (gen_v * id_v)
    age_gen = jnp.mean((age_p - age_m) * (gen_p - gen_m), axis=0, keepdims=True) ** 2 / (age_v * gen_v)
    cano = (id_age + id_gen + age_gen) / 3.0                                 # (1, 1)

    # ---------------- pack the 7 scalars into one lane-dense (1,128) slab -----
    lane = cols[0:1, :]
    out_ref[...] = (id_loss * (lane == 0).astype(jnp.float32)
                    + id_acc * (lane == 1).astype(jnp.float32)
                    + age_loss * (lane == 2).astype(jnp.float32)
                    + age_acc * (lane == 3).astype(jnp.float32)
                    + gen_loss * (lane == 4).astype(jnp.float32)
                    + gen_acc * (lane == 5).astype(jnp.float32)
                    + cano * (lane == 6).astype(jnp.float32))


# ------------------------------ JAX wrapper -----------------------------------
_fused_call = pl.pallas_call(
    _fused_kernel,
    out_shape=jax.ShapeDtypeStruct((1, PADW), jnp.float32),
    in_specs=[_VMEM] * 6,
    out_specs=_VMEM,
)


@jax.jit
def multitask_dal_forward(params, embeddings, labels, age_groups, genders):
    lab = jnp.stack([labels.astype(jnp.int32),
                     age_groups.astype(jnp.int32),
                     genders.astype(jnp.int32)], axis=1)                     # (B, 3)
    out = _fused_call(embeddings, lab,
                      params["w_e"], params["head_w1"], params["head_w2"],
                      params["consts"])
    v = out[0]
    return (v[0], v[1], v[2], v[3], v[4], v[5], v[6])


# ------------------------------ params init -----------------------------------
def init_params(key):
    ks = jax.random.split(key, 8)
    s = 0.02

    def lin(k, fin, fout):
        kw, kb = jax.random.split(k)
        w = jax.random.normal(kw, (fin, fout), jnp.float32) * s
        b = jax.random.normal(kb, (1, fout), jnp.float32) * s
        return w, b

    # FRFM
    wa, ba = lin(ks[0], E, E)
    wg, bg = lin(ks[1], E, E)
    # CosFace margin-loss weight (E, NUM_ID); column norms hoisted to the wrapper.
    cos_w = jax.random.normal(ks[2], (E, NUM_ID), jnp.float32) * s
    cos_w_bf = cos_w.astype(jnp.bfloat16)
    inv_wnorm = 1.0 / jnp.sqrt(jnp.maximum(
        jnp.sum(cos_w_bf.astype(jnp.float32) ** 2, axis=0, keepdims=True), 1e-24))  # (1, NUM_ID)

    # age / gender classifiers
    age_w1, age_b1 = lin(ks[3], E, H)
    age_w2, age_b2 = lin(ks[4], H, NUM_AGE)
    gen_w1, gen_b1 = lin(ks[5], E, H)
    gen_w2, gen_b2 = lin(ks[6], H, NUM_GENDER)

    # BCCM predictors (Linear(E,1,bias=False)): rows = [id, age, gender]
    bccm_w = jax.random.normal(ks[7], (3, E), jnp.float32) * s

    p = {}
    # bf16 slab sharing the E-row contraction: [FRFM Wa | FRFM Wg | CosFace W]
    p["w_e"] = jnp.concatenate([wa, wg, cos_w], axis=1).astype(jnp.bfloat16)   # (E, 2E+NUM_ID)

    # block-diagonal fused classifier weights
    w1f = jnp.zeros((2 * E, 2 * H), jnp.float32)
    w1f = w1f.at[:E, :H].set(age_w1)
    w1f = w1f.at[E:, H:].set(gen_w1)
    p["head_w1"] = w1f.astype(jnp.bfloat16)                                    # (2E, 2H)

    w2f = jnp.zeros((2 * H, 2 * PADW), jnp.float32)
    w2f = w2f.at[:H, :NUM_AGE].set(age_w2)
    w2f = w2f.at[H:, PADW:PADW + NUM_GENDER].set(gen_w2)
    p["head_w2"] = w2f.astype(jnp.bfloat16)                                    # (2H, 2*PADW)

    # single f32 constant slab
    b2f = jnp.zeros((1, 2 * PADW), jnp.float32)
    b2f = b2f.at[:, :NUM_AGE].set(age_b2)
    b2f = b2f.at[:, PADW:PADW + NUM_GENDER].set(gen_b2)
    consts = jnp.concatenate([
        jnp.concatenate([ba, bg], axis=1),                    # FRFM bias       (1, 2E)
        jnp.concatenate([age_b1, gen_b1], axis=1),            # layer-1 bias    (1, 2H)
        jnp.ones((1, 2 * H), jnp.float32),                    # BN gamma        (1, 2H)
        jnp.zeros((1, 2 * H), jnp.float32),                   # BN beta         (1, 2H)
        b2f,                                                  # layer-2 bias    (1, 2*PADW)
        inv_wnorm,                                            # cos 1/||w||     (1, NUM_ID)
        bccm_w.reshape(1, 3 * E),                             # BCCM rows       (1, 3E)
    ], axis=1)
    assert consts.shape == (1, CONSTS_K)
    p["consts"] = consts
    return p


if __name__ == "__main__":
    key = jax.random.PRNGKey(0)
    kp, kx, kl, ka, kg = jax.random.split(key, 5)

    params = init_params(kp)
    embeddings = jax.random.normal(kx, (B, E), jnp.float32)
    labels = jax.random.randint(kl, (B,), 0, NUM_ID)
    age_groups = jax.random.randint(ka, (B,), 0, NUM_AGE)
    genders = jax.random.randint(kg, (B,), 0, NUM_GENDER)

    outs = multitask_dal_forward(params, embeddings, labels, age_groups, genders)
    outs = jax.block_until_ready(outs)
    print("KERNEL_OK")
</pallas_src>

<mosaic_0001>
module attributes {stable_mosaic.version = 11 : i64} {
  func.func @_fused_kernel(%arg0: memref<8x128xf32, #tpu.memory_space<vmem>>, %arg1: memref<8x3xi32, #tpu.memory_space<vmem>>, %arg2: memref<128x384xbf16, #tpu.memory_space<vmem>>, %arg3: memref<256x512xbf16, #tpu.memory_space<vmem>>, %arg4: memref<512x256xbf16, #tpu.memory_space<vmem>>, %arg5: memref<1x2560xf32, #tpu.memory_space<vmem>>, %arg6: memref<1x128xf32, #tpu.memory_space<vmem>>) attributes {dimension_semantics = [], scalar_prefetch = 0 : i64, scratch_operands = 0 : i64, tpu.core_type = #tpu.core_type<tc>} {
    %c0 = arith.constant 0 : index
    %c0_0 = arith.constant 0 : index
    %0 = vector.load %arg0[%c0, %c0_0] : memref<8x128xf32, #tpu.memory_space<vmem>>, vector<8x128xf32>
    %1 = arith.truncf %0 : vector<8x128xf32> to vector<8x128xbf16>
    %c0_1 = arith.constant 0 : index
    %c0_2 = arith.constant 0 : index
    %2 = vector.load %arg1[%c0_1, %c0_2] : memref<8x3xi32, #tpu.memory_space<vmem>>, vector<8x3xi32>
    %3 = tpu.iota {dimensions = array<i32: 1>} : vector<8x128xi32>
    %c0_3 = arith.constant 0 : index
    %c0_4 = arith.constant 0 : index
    %4 = vector.load %arg2[%c0_3, %c0_4] : memref<128x384xbf16, #tpu.memory_space<vmem>>, vector<128x256xbf16>
    %cst = arith.constant dense<0.000000e+00> : vector<8x256xf32>
    %5 = tpu.matmul %1, %4, %cst {dimension_numbers = #tpu.dot_dimension_numbers<[1], [0], [0], [1], [0, 0, 1, 1], [], []>} : vector<8x128xbf16>, vector<128x256xbf16>, vector<8x256xf32> -> vector<8x256xf32>
    %c0_5 = arith.constant 0 : index
    %c0_6 = arith.constant 0 : index
    %6 = vector.load %arg5[%c0_5, %c0_6] : memref<1x2560xf32, #tpu.memory_space<vmem>>, vector<1x256xf32>
    %7 = vector.broadcast %6 : vector<1x256xf32> to vector<8x256xf32>
    %8 = arith.addf %5, %7 : vector<8x256xf32>
    %cst_7 = arith.constant 0.000000e+00 : f32
    %9 = vector.broadcast %cst_7 : f32 to vector<8x256xf32>
    %10 = arith.maximumf %8, %9 : vector<8x256xf32>
    %11 = vector.extract_strided_slice %10 {offsets = [0, 0], sizes = [8, 128], strides = [1, 1]} : vector<8x256xf32> to vector<8x128xf32>
    %12 = vector.extract_strided_slice %10 {offsets = [0, 128], sizes = [8, 128], strides = [1, 1]} : vector<8x256xf32> to vector<8x128xf32>
    %13 = arith.subf %0, %11 : vector<8x128xf32>
    %14 = arith.subf %13, %12 : vector<8x128xf32>
    %15 = arith.mulf %14, %14 : vector<8x128xf32>
    %cst_8 = arith.constant dense<0.000000e+00> : vector<8xf32>
    %16 = vector.multi_reduction <add>, %15, %cst_8 [1] : vector<8x128xf32> to vector<8xf32>
    %17 = vector.shape_cast %16 : vector<8xf32> to vector<8x1xf32>
    %cst_9 = arith.constant 1.000000e-24 : f32
    %18 = vector.broadcast %cst_9 : f32 to vector<8x1xf32>
    %19 = arith.maximumf %17, %18 : vector<8x1xf32>
    %20 = math.rsqrt %19 : vector<8x1xf32>
    %21 = arith.truncf %14 : vector<8x128xf32> to vector<8x128xbf16>
    %c0_10 = arith.constant 0 : index
    %c256 = arith.constant 256 : index
    %22 = vector.load %arg2[%c0_10, %c256] : memref<128x384xbf16, #tpu.memory_space<vmem>>, vector<128x128xbf16>
    %cst_11 = arith.constant dense<0.000000e+00> : vector<8x128xf32>
    %23 = tpu.matmul %21, %22, %cst_11 {dimension_numbers = #tpu.dot_dimension_numbers<[1], [0], [0], [1], [0, 0, 1, 1], [], []>} : vector<8x128xbf16>, vector<128x128xbf16>, vector<8x128xf32> -> vector<8x128xf32>
    %24 = vector.broadcast %20 : vector<8x1xf32> to vector<8x128xf32>
    %25 = arith.mulf %23, %24 : vector<8x128xf32>
    %c0_12 = arith.constant 0 : index
    %c2048 = arith.constant 2048 : index
    %26 = vector.load %arg5[%c0_12, %c2048] : memref<1x2560xf32, #tpu.memory_space<vmem>>, vector<1x128xf32>
    %27 = vector.broadcast %26 : vector<1x128xf32> to vector<8x128xf32>
    %28 = arith.mulf %25, %27 : vector<8x128xf32>
    %29 = vector.extract_strided_slice %2 {offsets = [0, 0], sizes = [8, 1], strides = [1, 1]} : vector<8x3xi32> to vector<8x1xi32>
    %30 = vector.broadcast %29 : vector<8x1xi32> to vector<8x128xi32>
    %31 = arith.cmpi eq, %3, %30 : vector<8x128xi32>
    %32 = arith.extui %31 : vector<8x128xi1> to vector<8x128xi32>
    %33 = arith.sitofp %32 : vector<8x128xi32> to vector<8x128xf32>
    %cst_13 = arith.constant 3.500000e-01 : f32
    %34 = vector.broadcast %cst_13 : f32 to vector<8x128xf32>
    %35 = arith.mulf %34, %33 : vector<8x128xf32>
    %36 = arith.subf %28, %35 : vector<8x128xf32>
    %cst_14 = arith.constant 6.400000e+01 : f32
    %37 = vector.broadcast %cst_14 : f32 to vector<8x128xf32>
    %38 = arith.mulf %37, %36 : vector<8x128xf32>
    %cst_15 = arith.constant dense<0xFF800000> : vector<8xf32>
    %39 = vector.multi_reduction <maximumf>, %38, %cst_15 [1] : vector<8x128xf32> to vector<8xf32>
    %40 = vector.shape_cast %39 : vector<8xf32> to vector<8x1xf32>
    %41 = vector.broadcast %40 : vector<8x1xf32> to vector<8x128xf32>
    %42 = arith.subf %38, %41 : vector<8x128xf32>
    %43 = math.exp %42 : vector<8x128xf32>
    %cst_16 = arith.constant dense<0.000000e+00> : vector<8xf32>
    %44 = vector.multi_reduction <add>, %43, %cst_16 [1] : vector<8x128xf32> to vector<8xf32>
    %45 = vector.shape_cast %44 : vector<8xf32> to vector<8x1xf32>
    %46 = math.log %45 : vector<8x1xf32>
    %47 = arith.addf %46, %40 : vector<8x1xf32>
    %48 = arith.mulf %38, %33 : vector<8x128xf32>
    %cst_17 = arith.constant dense<0.000000e+00> : vector<8xf32>
    %49 = vector.multi_reduction <add>, %48, %cst_17 [1] : vector<8x128xf32> to vector<8xf32>
    %50 = vector.shape_cast %49 : vector<8xf32> to vector<8x1xf32>
    %51 = arith.subf %47, %50 : vector<8x1xf32>
    %cst_18 = arith.constant dense<0.000000e+00> : vector<1xf32>
    %52 = vector.multi_reduction <add>, %51, %cst_18 [0] : vector<8x1xf32> to vector<1xf32>
    %53 = vector.shape_cast %52 : vector<1xf32> to vector<1x1xf32>
    %cst_19 = arith.constant 1.250000e-01 : f32
    %54 = vector.broadcast %cst_19 : f32 to vector<1x1xf32>
    %55 = arith.mulf %53, %54 : vector<1x1xf32>
    %56 = arith.cmpf oge, %50, %40 : vector<8x1xf32>
    %57 = arith.extui %56 : vector<8x1xi1> to vector<8x1xi32>
    %58 = arith.sitofp %57 : vector<8x1xi32> to vector<8x1xf32>
    %cst_20 = arith.constant dense<0.000000e+00> : vector<1xf32>
    %59 = vector.multi_reduction <add>, %58, %cst_20 [0] : vector<8x1xf32> to vector<1xf32>
    %60 = vector.shape_cast %59 : vector<1xf32> to vector<1x1xf32>
    %cst_21 = arith.constant 1.250000e-01 : f32
    %61 = vector.broadcast %cst_21 : f32 to vector<1x1xf32>
    %62 = arith.mulf %60, %61 : vector<1x1xf32>
    %63 = arith.truncf %10 : vector<8x256xf32> to vector<8x256xbf16>
    %c0_22 = arith.constant 0 : index
    %c0_23 = arith.constant 0 : index
    %64 = vector.load %arg3[%c0_22, %c0_23] : memref<256x512xbf16, #tpu.memory_space<vmem>>, vector<256x512xbf16>
    %cst_24 = arith.constant dense<0.000000e+00> : vector<8x512xf32>
    %65 = tpu.matmul %63, %64, %cst_24 {dimension_numbers = #tpu.dot_dimension_numbers<[1], [0], [0], [1], [0, 0, 1, 1], [], []>} : vector<8x256xbf16>, vector<256x512xbf16>, vector<8x512xf32> -> vector<8x512xf32>
    %c0_25 = arith.constant 0 : index
    %c256_26 = arith.constant 256 : index
    %66 = vector.load %arg5[%c0_25, %c256_26] : memref<1x2560xf32, #tpu.memory_space<vmem>>, vector<1x512xf32>
    %67 = vector.broadcast %66 : vector<1x512xf32> to vector<8x512xf32>
    %68 = arith.addf %65, %67 : vector<8x512xf32>
    %cst_27 = arith.constant dense<0.000000e+00> : vector<512xf32>
    %69 = vector.multi_reduction <add>, %68, %cst_27 [0] : vector<8x512xf32> to vector<512xf32>
    %70 = vector.shape_cast %69 : vector<512xf32> to vector<1x512xf32>
    %cst_28 = arith.constant 8.000000e+00 : f32
    %71 = vector.broadcast %cst_28 : f32 to vector<1x512xf32>
    %72 = arith.divf %70, %71 : vector<1x512xf32>
    %73 = vector.broadcast %72 : vector<1x512xf32> to vector<8x512xf32>
    %74 = arith.subf %68, %73 : vector<8x512xf32>
    %75 = arith.mulf %74, %74 : vector<8x512xf32>
    %cst_29 = arith.constant dense<0.000000e+00> : vector<512xf32>
    %76 = vector.multi_reduction <add>, %75, %cst_29 [0] : vector<8x512xf32> to vector<512xf32>
    %77 = vector.shape_cast %76 : vector<512xf32> to vector<1x512xf32>
    %cst_30 = arith.constant 8.000000e+00 : f32
    %78 = vector.broadcast %cst_30 : f32 to vector<1x512xf32>
    %79 = arith.divf %77, %78 : vector<1x512xf32>
    %80 = vector.broadcast %72 : vector<1x512xf32> to vector<8x512xf32>
    %81 = arith.subf %68, %80 : vector<8x512xf32>
    %cst_31 = arith.constant 9.99999974E-6 : f32
    %82 = vector.broadcast %cst_31 : f32 to vector<1x512xf32>
    %83 = arith.addf %79, %82 : vector<1x512xf32>
    %84 = math.rsqrt %83 : vector<1x512xf32>
    %85 = vector.broadcast %84 : vector<1x512xf32> to vector<8x512xf32>
    %86 = arith.mulf %81, %85 : vector<8x512xf32>
    %c0_32 = arith.constant 0 : index
    %c768 = arith.constant 768 : index
    %87 = vector.load %arg5[%c0_32, %c768] : memref<1x2560xf32, #tpu.memory_space<vmem>>, vector<1x512xf32>
    %88 = vector.broadcast %87 : vector<1x512xf32> to vector<8x512xf32>
    %89 = arith.mulf %86, %88 : vector<8x512xf32>
    %c0_33 = arith.constant 0 : index
    %c1280 = arith.constant 1280 : index
    %90 = vector.load %arg5[%c0_33, %c1280] : memref<1x2560xf32, #tpu.memory_space<vmem>>, vector<1x512xf32>
    %91 = vector.broadcast %90 : vector<1x512xf32> to vector<8x512xf32>
    %92 = arith.addf %89, %91 : vector<8x512xf32>
    %cst_34 = arith.constant 0.000000e+00 : f32
    %93 = vector.broadcast %cst_34 : f32 to vector<8x512xf32>
    %94 = arith.maximumf %92, %93 : vector<8x512xf32>
    %95 = arith.truncf %94 : vector<8x512xf32> to vector<8x512xbf16>
    %c0_35 = arith.constant 0 : index
    %c0_36 = arith.constant 0 : index
    %96 = vector.load %arg4[%c0_35, %c0_36] : memref<512x256xbf16, #tpu.memory_space<vmem>>, vector<512x256xbf16>
    %cst_37 = arith.constant dense<0.000000e+00> : vector<8x256xf32>
    %97 = tpu.matmul %95, %96, %cst_37 {dimension_numbers = #tpu.dot_dimension_numbers<[1], [0], [0], [1], [0, 0, 1, 1], [], []>} : vector<8x512xbf16>, vector<512x256xbf16>, vector<8x256xf32> -> vector<8x256xf32>
    %c0_38 = arith.constant 0 : index
    %c1792 = arith.constant 1792 : index
    %98 = vector.load %arg5[%c0_38, %c1792] : memref<1x2560xf32, #tpu.memory_space<vmem>>, vector<1x256xf32>
    %99 = vector.broadcast %98 : vector<1x256xf32> to vector<8x256xf32>
    %100 = arith.addf %97, %99 : vector<8x256xf32>
    %101 = vector.extract_strided_slice %100 {offsets = [0, 0], sizes = [8, 128], strides = [1, 1]} : vector<8x256xf32> to vector<8x128xf32>
    %102 = vector.extract_strided_slice %100 {offsets = [0, 128], sizes = [8, 128], strides = [1, 1]} : vector<8x256xf32> to vector<8x128xf32>
    %103 = vector.extract_strided_slice %2 {offsets = [0, 1], sizes = [8, 1], strides = [1, 1]} : vector<8x3xi32> to vector<8x1xi32>
    %104 = vector.broadcast %103 : vector<8x1xi32> to vector<8x128xi32>
    %105 = arith.cmpi eq, %3, %104 : vector<8x128xi32>
    %106 = arith.extui %105 : vector<8x128xi1> to vector<8x128xi32>
    %107 = arith.sitofp %106 : vector<8x128xi32> to vector<8x128xf32>
    %c3_i32 = arith.constant 3 : i32
    %108 = vector.broadcast %c3_i32 : i32 to vector<8x128xi32>
    %109 = arith.cmpi slt, %3, %108 : vector<8x128xi32>
    %cst_39 = arith.constant -1.000000e+30 : f32
    %110 = vector.broadcast %cst_39 : f32 to vector<8x128xf32>
    %111 = arith.select %109, %101, %110 : vector<8x128xi1>, vector<8x128xf32>
    %cst_40 = arith.constant dense<0xFF800000> : vector<8xf32>
    %112 = vector.multi_reduction <maximumf>, %111, %cst_40 [1] : vector<8x128xf32> to vector<8xf32>
    %113 = vector.shape_cast %112 : vector<8xf32> to vector<8x1xf32>
    %114 = vector.broadcast %113 : vector<8x1xf32> to vector<8x128xf32>
    %115 = arith.subf %111, %114 : vector<8x128xf32>
    %116 = math.exp %115 : vector<8x128xf32>
    %cst_41 = arith.constant dense<0.000000e+00> : vector<8xf32>
    %117 = vector.multi_reduction <add>, %116, %cst_41 [1] : vector<8x128xf32> to vector<8xf32>
    %118 = vector.shape_cast %117 : vector<8xf32> to vector<8x1xf32>
    %119 = math.log %118 : vector<8x1xf32>
    %120 = arith.addf %119, %113 : vector<8x1xf32>
    %121 = arith.mulf %101, %107 : vector<8x128xf32>
    %cst_42 = arith.constant dense<0.000000e+00> : vector<8xf32>
    %122 = vector.multi_reduction <add>, %121, %cst_42 [1] : vector<8x128xf32> to vector<8xf32>
    %123 = vector.shape_cast %122 : vector<8xf32> to vector<8x1xf32>
    %124 = arith.subf %120, %123 : vector<8x1xf32>
    %cst_43 = arith.constant dense<0.000000e+00> : vector<1xf32>
    %125 = vector.multi_reduction <add>, %124, %cst_43 [0] : vector<8x1xf32> to vector<1xf32>
    %126 = vector.shape_cast %125 : vector<1xf32> to vector<1x1xf32>
    %cst_44 = arith.constant 1.250000e-01 : f32
    %127 = vector.broadcast %cst_44 : f32 to vector<1x1xf32>
    %128 = arith.mulf %126, %127 : vector<1x1xf32>
    %129 = arith.cmpf oge, %123, %113 : vector<8x1xf32>
    %130 = arith.extui %129 : vector<8x1xi1> to vector<8x1xi32>
    %131 = arith.sitofp %130 : vector<8x1xi32> to vector<8x1xf32>
    %cst_45 = arith.constant dense<0.000000e+00> : vector<1xf32>
    %132 = vector.multi_reduction <add>, %131, %cst_45 [0] : vector<8x1xf32> to vector<1xf32>
    %133 = vector.shape_cast %132 : vector<1xf32> to vector<1x1xf32>
    %cst_46 = arith.constant 1.250000e-01 : f32
    %134 = vector.broadcast %cst_46 : f32 to vector<1x1xf32>
    %135 = arith.mulf %133, %134 : vector<1x1xf32>
    %136 = vector.extract_strided_slice %2 {offsets = [0, 2], sizes = [8, 1], strides = [1, 1]} : vector<8x3xi32> to vector<8x1xi32>
    %137 = vector.broadcast %136 : vector<8x1xi32> to vector<8x128xi32>
    %138 = arith.cmpi eq, %3, %137 : vector<8x128xi32>
    %139 = arith.extui %138 : vector<8x128xi1> to vector<8x128xi32>
    %140 = arith.sitofp %139 : vector<8x128xi32> to vector<8x128xf32>
    %c2_i32 = arith.constant 2 : i32
    %141 = vector.broadcast %c2_i32 : i32 to vector<8x128xi32>
    %142 = arith.cmpi slt, %3, %141 : vector<8x128xi32>
    %cst_47 = arith.constant -1.000000e+30 : f32
    %143 = vector.broadcast %cst_47 : f32 to vector<8x128xf32>
    %144 = arith.select %142, %102, %143 : vector<8x128xi1>, vector<8x128xf32>
    %cst_48 = arith.constant dense<0xFF800000> : vector<8xf32>
    %145 = vector.multi_reduction <maximumf>, %144, %cst_48 [1] : vector<8x128xf32> to vector<8xf32>
    %146 = vector.shape_cast %145 : vector<8xf32> to vector<8x1xf32>
    %147 = vector.broadcast %146 : vector<8x1xf32> to vector<8x128xf32>
    %148 = arith.subf %144, %147 : vector<8x128xf32>
    %149 = math.exp %148 : vector<8x128xf32>
    %cst_49 = arith.constant dense<0.000000e+00> : vector<8xf32>
    %150 = vector.multi_reduction <add>, %149, %cst_49 [1] : vector<8x128xf32> to vector<8xf32>
    %151 = vector.shape_cast %150 : vector<8xf32> to vector<8x1xf32>
    %152 = math.log %151 : vector<8x1xf32>
    %153 = arith.addf %152, %146 : vector<8x1xf32>
    %154 = arith.mulf %102, %140 : vector<8x128xf32>
    %cst_50 = arith.constant dense<0.000000e+00> : vector<8xf32>
    %155 = vector.multi_reduction <add>, %154, %cst_50 [1] : vector<8x128xf32> to vector<8xf32>
    %156 = vector.shape_cast %155 : vector<8xf32> to vector<8x1xf32>
    %157 = arith.subf %153, %156 : vector<8x1xf32>
    %cst_51 = arith.constant dense<0.000000e+00> : vector<1xf32>
    %158 = vector.multi_reduction <add>, %157, %cst_51 [0] : vector<8x1xf32> to vector<1xf32>
    %159 = vector.shape_cast %158 : vector<1xf32> to vector<1x1xf32>
    %cst_52 = arith.constant 1.250000e-01 : f32
    %160 = vector.broadcast %cst_52 : f32 to vector<1x1xf32>
    %161 = arith.mulf %159, %160 : vector<1x1xf32>
    %162 = arith.cmpf oge, %156, %146 : vector<8x1xf32>
    %163 = arith.extui %162 : vector<8x1xi1> to vector<8x1xi32>
    %164 = arith.sitofp %163 : vector<8x1xi32> to vector<8x1xf32>
    %cst_53 = arith.constant dense<0.000000e+00> : vector<1xf32>
    %165 = vector.multi_reduction <add>, %164, %cst_53 [0] : vector<8x1xf32> to vector<1xf32>
    %166 = vector.shape_cast %165 : vector<1xf32> to vector<1x1xf32>
    %cst_54 = arith.constant 1.250000e-01 : f32
    %167 = vector.broadcast %cst_54 : f32 to vector<1x1xf32>
    %168 = arith.mulf %166, %167 : vector<1x1xf32>
    %c0_55 = arith.constant 0 : index
    %c2176 = arith.constant 2176 : index
    %169 = vector.load %arg5[%c0_55, %c2176] : memref<1x2560xf32, #tpu.memory_space<vmem>>, vector<1x128xf32>
    %c0_56 = arith.constant 0 : index
    %c2304 = arith.constant 2304 : index
    %170 = vector.load %arg5[%c0_56, %c2304] : memref<1x2560xf32, #tpu.memory_space<vmem>>, vector<1x128xf32>
    %c0_57 = arith.constant 0 : index
    %c2432 = arith.constant 2432 : index
    %171 = vector.load %arg5[%c0_57, %c2432] : memref<1x2560xf32, #tpu.memory_space<vmem>>, vector<1x128xf32>
    %172 = vector.broadcast %169 : vector<1x128xf32> to vector<8x128xf32>
    %173 = arith.mulf %14, %172 : vector<8x128xf32>
    %cst_58 = arith.constant dense<0.000000e+00> : vector<8xf32>
    %174 = vector.multi_reduction <add>, %173, %cst_58 [1] : vector<8x128xf32> to vector<8xf32>
    %175 = vector.shape_cast %174 : vector<8xf32> to vector<8x1xf32>
    %176 = vector.broadcast %170 : vector<1x128xf32> to vector<8x128xf32>
    %177 = arith.mulf %11, %176 : vector<8x128xf32>
    %cst_59 = arith.constant dense<0.000000e+00> : vector<8xf32>
    %178 = vector.multi_reduction <add>, %177, %cst_59 [1] : vector<8x128xf32> to vector<8xf32>
    %179 = vector.shape_cast %178 : vector<8xf32> to vector<8x1xf32>
    %180 = vector.broadcast %171 : vector<1x128xf32> to vector<8x128xf32>
    %181 = arith.mulf %12, %180 : vector<8x128xf32>
    %cst_60 = arith.constant dense<0.000000e+00> : vector<8xf32>
    %182 = vector.multi_reduction <add>, %181, %cst_60 [1] : vector<8x128xf32> to vector<8xf32>
    %183 = vector.shape_cast %182 : vector<8xf32> to vector<8x1xf32>
    %cst_61 = arith.constant dense<0.000000e+00> : vector<1xf32>
    %184 = vector.multi_reduction <add>, %175, %cst_61 [0] : vector<8x1xf32> to vector<1xf32>
    %185 = vector.shape_cast %184 : vector<1xf32> to vector<1x1xf32>
    %cst_62 = arith.constant 8.000000e+00 : f32
    %186 = vector.broadcast %cst_62 : f32 to vector<1x1xf32>
    %187 = arith.divf %185, %186 : vector<1x1xf32>
    %cst_63 = arith.constant dense<0.000000e+00> : vector<1xf32>
    %188 = vector.multi_reduction <add>, %179, %cst_63 [0] : vector<8x1xf32> to vector<1xf32>
    %189 = vector.shape_cast %188 : vector<1xf32> to vector<1x1xf32>
    %cst_64 = arith.constant 8.000000e+00 : f32
    %190 = vector.broadcast %cst_64 : f32 to vector<1x1xf32>
    %191 = arith.divf %189, %190 : vector<1x1xf32>
    %cst_65 = arith.constant dense<0.000000e+00> : vector<1xf32>
    %192 = vector.multi_reduction <add>, %183, %cst_65 [0] : vector<8x1xf32> to vector<1xf32>
    %193 = vector.shape_cast %192 : vector<1xf32> to vector<1x1xf32>
    %cst_66 = arith.constant 8.000000e+00 : f32
    %194 = vector.broadcast %cst_66 : f32 to vector<1x1xf32>
    %195 = arith.divf %193, %194 : vector<1x1xf32>
    %196 = vector.broadcast %187 : vector<1x1xf32> to vector<8x1xf32>
    %197 = arith.subf %175, %196 : vector<8x1xf32>
    %198 = arith.mulf %197, %197 : vector<8x1xf32>
    %cst_67 = arith.constant dense<0.000000e+00> : vector<1xf32>
    %199 = vector.multi_reduction <add>, %198, %cst_67 [0] : vector<8x1xf32> to vector<1xf32>
    %200 = vector.shape_cast %199 : vector<1xf32> to vector<1x1xf32>
    %cst_68 = arith.constant 7.000000e+00 : f32
    %201 = vector.broadcast %cst_68 : f32 to vector<1x1xf32>
    %202 = arith.divf %200, %201 : vector<1x1xf32>
    %cst_69 = arith.constant 9.99999997E-7 : f32
    %203 = vector.broadcast %cst_69 : f32 to vector<1x1xf32>
    %204 = arith.addf %202, %203 : vector<1x1xf32>
    %205 = vector.broadcast %191 : vector<1x1xf32> to vector<8x1xf32>
    %206 = arith.subf %179, %205 : vector<8x1xf32>
    %207 = arith.mulf %206, %206 : vector<8x1xf32>
    %cst_70 = arith.constant dense<0.000000e+00> : vector<1xf32>
    %208 = vector.multi_reduction <add>, %207, %cst_70 [0] : vector<8x1xf32> to vector<1xf32>
    %209 = vector.shape_cast %208 : vector<1xf32> to vector<1x1xf32>
    %cst_71 = arith.constant 7.000000e+00 : f32
    %210 = vector.broadcast %cst_71 : f32 to vector<1x1xf32>
    %211 = arith.divf %209, %210 : vector<1x1xf32>
    %cst_72 = arith.constant 9.99999997E-7 : f32
    %212 = vector.broadcast %cst_72 : f32 to vector<1x1xf32>
    %213 = arith.addf %211, %212 : vector<1x1xf32>
    %214 = vector.broadcast %195 : vector<1x1xf32> to vector<8x1xf32>
    %215 = arith.subf %183, %214 : vector<8x1xf32>
    %216 = arith.mulf %215, %215 : vector<8x1xf32>
    %cst_73 = arith.constant dense<0.000000e+00> : vector<1xf32>
    %217 = vector.multi_reduction <add>, %216, %cst_73 [0] : vector<8x1xf32> to vector<1xf32>
    %218 = vector.shape_cast %217 : vector<1xf32> to vector<1x1xf32>
    %cst_74 = arith.constant 7.000000e+00 : f32
    %219 = vector.broadcast %cst_74 : f32 to vector<1x1xf32>
    %220 = arith.divf %218, %219 : vector<1x1xf32>
    %cst_75 = arith.constant 9.99999997E-7 : f32
    %221 = vector.broadcast %cst_75 : f32 to vector<1x1xf32>
    %222 = arith.addf %220, %221 : vector<1x1xf32>
    %223 = vector.broadcast %191 : vector<1x1xf32> to vector<8x1xf32>
    %224 = arith.subf %179, %223 : vector<8x1xf32>
    %225 = vector.broadcast %187 : vector<1x1xf32> to vector<8x1xf32>
    %226 = arith.subf %175, %225 : vector<8x1xf32>
    %227 = arith.mulf %224, %226 : vector<8x1xf32>
    %cst_76 = arith.constant dense<0.000000e+00> : vector<1xf32>
    %228 = vector.multi_reduction <add>, %227, %cst_76 [0] : vector<8x1xf32> to vector<1xf32>
    %229 = vector.shape_cast %228 : vector<1xf32> to vector<1x1xf32>
    %cst_77 = arith.constant 8.000000e+00 : f32
    %230 = vector.broadcast %cst_77 : f32 to vector<1x1xf32>
    %231 = arith.divf %229, %230 : vector<1x1xf32>
    %232 = arith.mulf %231, %231 : vector<1x1xf32>
    %233 = arith.mulf %213, %204 : vector<1x1xf32>
    %234 = arith.divf %232, %233 : vector<1x1xf32>
    %235 = vector.broadcast %195 : vector<1x1xf32> to vector<8x1xf32>
    %236 = arith.subf %183, %235 : vector<8x1xf32>
    %237 = vector.broadcast %187 : vector<1x1xf32> to vector<8x1xf32>
    %238 = arith.subf %175, %237 : vector<8x1xf32>
    %239 = arith.mulf %236, %238 : vector<8x1xf32>
    %cst_78 = arith.constant dense<0.000000e+00> : vector<1xf32>
    %240 = vector.multi_reduction <add>, %239, %cst_78 [0] : vector<8x1xf32> to vector<1xf32>
    %241 = vector.shape_cast %240 : vector<1xf32> to vector<1x1xf32>
    %cst_79 = arith.constant 8.000000e+00 : f32
    %242 = vector.broadcast %cst_79 : f32 to vector<1x1xf32>
    %243 = arith.divf %241, %242 : vector<1x1xf32>
    %244 = arith.mulf %243, %243 : vector<1x1xf32>
    %245 = arith.mulf %222, %204 : vector<1x1xf32>
    %246 = arith.divf %244, %245 : vector<1x1xf32>
    %247 = vector.broadcast %191 : vector<1x1xf32> to vector<8x1xf32>
    %248 = arith.subf %179, %247 : vector<8x1xf32>
    %249 = vector.broadcast %195 : vector<1x1xf32> to vector<8x1xf32>
    %250 = arith.subf %183, %249 : vector<8x1xf32>
    %251 = arith.mulf %248, %250 : vector<8x1xf32>
    %cst_80 = arith.constant dense<0.000000e+00> : vector<1xf32>
    %252 = vector.multi_reduction <add>, %251, %cst_80 [0] : vector<8x1xf32> to vector<1xf32>
    %253 = vector.shape_cast %252 : vector<1xf32> to vector<1x1xf32>
    %cst_81 = arith.constant 8.000000e+00 : f32
    %254 = vector.broadcast %cst_81 : f32 to vector<1x1xf32>
    %255 = arith.divf %253, %254 : vector<1x1xf32>
    %256 = arith.mulf %255, %255 : vector<1x1xf32>
    %257 = arith.mulf %213, %222 : vector<1x1xf32>
    %258 = arith.divf %256, %257 : vector<1x1xf32>
    %259 = arith.addf %234, %246 : vector<1x1xf32>
    %260 = arith.addf %259, %258 : vector<1x1xf32>
    %cst_82 = arith.constant 3.000000e+00 : f32
    %261 = vector.broadcast %cst_82 : f32 to vector<1x1xf32>
    %262 = arith.divf %260, %261 : vector<1x1xf32>
    %263 = vector.extract_strided_slice %3 {offsets = [0, 0], sizes = [1, 128], strides = [1, 1]} : vector<8x128xi32> to vector<1x128xi32>
    %c0_i32 = arith.constant 0 : i32
    %264 = vector.broadcast %c0_i32 : i32 to vector<1x128xi32>
    %265 = arith.cmpi eq, %263, %264 : vector<1x128xi32>
    %266 = arith.extui %265 : vector<1x128xi1> to vector<1x128xi32>
    %267 = arith.sitofp %266 : vector<1x128xi32> to vector<1x128xf32>
    %268 = vector.broadcast %55 : vector<1x1xf32> to vector<1x128xf32>
    %269 = arith.mulf %268, %267 : vector<1x128xf32>
    %c1_i32 = arith.constant 1 : i32
    %270 = vector.broadcast %c1_i32 : i32 to vector<1x128xi32>
    %271 = arith.cmpi eq, %263, %270 : vector<1x128xi32>
    %272 = arith.extui %271 : vector<1x128xi1> to vector<1x128xi32>
    %273 = arith.sitofp %272 : vector<1x128xi32> to vector<1x128xf32>
    %274 = vector.broadcast %62 : vector<1x1xf32> to vector<1x128xf32>
    %275 = arith.mulf %274, %273 : vector<1x128xf32>
    %276 = arith.addf %269, %275 : vector<1x128xf32>
    %c2_i32_83 = arith.constant 2 : i32
    %277 = vector.broadcast %c2_i32_83 : i32 to vector<1x128xi32>
    %278 = arith.cmpi eq, %263, %277 : vector<1x128xi32>
    %279 = arith.extui %278 : vector<1x128xi1> to vector<1x128xi32>
    %280 = arith.sitofp %279 : vector<1x128xi32> to vector<1x128xf32>
    %281 = vector.broadcast %128 : vector<1x1xf32> to vector<1x128xf32>
    %282 = arith.mulf %281, %280 : vector<1x128xf32>
    %283 = arith.addf %276, %282 : vector<1x128xf32>
    %c3_i32_84 = arith.constant 3 : i32
    %284 = vector.broadcast %c3_i32_84 : i32 to vector<1x128xi32>
    %285 = arith.cmpi eq, %263, %284 : vector<1x128xi32>
    %286 = arith.extui %285 : vector<1x128xi1> to vector<1x128xi32>
    %287 = arith.sitofp %286 : vector<1x128xi32> to vector<1x128xf32>
    %288 = vector.broadcast %135 : vector<1x1xf32> to vector<1x128xf32>
    %289 = arith.mulf %288, %287 : vector<1x128xf32>
    %290 = arith.addf %283, %289 : vector<1x128xf32>
    %c4_i32 = arith.constant 4 : i32
    %291 = vector.broadcast %c4_i32 : i32 to vector<1x128xi32>
    %292 = arith.cmpi eq, %263, %291 : vector<1x128xi32>
    %293 = arith.extui %292 : vector<1x128xi1> to vector<1x128xi32>
    %294 = arith.sitofp %293 : vector<1x128xi32> to vector<1x128xf32>
    %295 = vector.broadcast %161 : vector<1x1xf32> to vector<1x128xf32>
    %296 = arith.mulf %295, %294 : vector<1x128xf32>
    %297 = arith.addf %290, %296 : vector<1x128xf32>
    %c5_i32 = arith.constant 5 : i32
    %298 = vector.broadcast %c5_i32 : i32 to vector<1x128xi32>
    %299 = arith.cmpi eq, %263, %298 : vector<1x128xi32>
    %300 = arith.extui %299 : vector<1x128xi1> to vector<1x128xi32>
    %301 = arith.sitofp %300 : vector<1x128xi32> to vector<1x128xf32>
    %302 = vector.broadcast %168 : vector<1x1xf32> to vector<1x128xf32>
    %303 = arith.mulf %302, %301 : vector<1x128xf32>
    %304 = arith.addf %297, %303 : vector<1x128xf32>
    %c6_i32 = arith.constant 6 : i32
    %305 = vector.broadcast %c6_i32 : i32 to vector<1x128xi32>
    %306 = arith.cmpi eq, %263, %305 : vector<1x128xi32>
    %307 = arith.extui %306 : vector<1x128xi1> to vector<1x128xi32>
    %308 = arith.sitofp %307 : vector<1x128xi32> to vector<1x128xf32>
    %309 = vector.broadcast %262 : vector<1x1xf32> to vector<1x128xf32>
    %310 = arith.mulf %309, %308 : vector<1x128xf32>
    %311 = arith.addf %304, %310 : vector<1x128xf32>
    %c0_85 = arith.constant 0 : index
    %c0_86 = arith.constant 0 : index
    %312 = vector.load %arg6[%c0_85, %c0_86] : memref<1x128xf32, #tpu.memory_space<vmem>>, vector<1x128xf32>
    tpu.vector_store %arg6[%c0_85, %c0_86], %311 {strides = array<i32>} : memref<1x128xf32, #tpu.memory_space<vmem>>, vector<1x128xf32>,
    return
  }
}

</mosaic_0001>

<llo_original>
// kernel: multitask_dal_forward.1
$region0: #{multitask_dal_forward.1}
  #allocation0 [shape = 'u32[]', space=smem, size = 0x4, offset = 0x4, fixed_abs, tag = 'smem constant byte address 0x4 - core index']
  #allocation1 [shape = 'u32[144,128]{1,0:T(1,128)}', space=vmem, size = 0x12000, scoped, tag = 'internal scratch']
  %s0 = inlined_call_operand.vmem [shape: f32[8,128], index: 0, kind: input, shape index: {}]
  %s1 = inlined_call_operand.vmem [shape: s32[8,3], index: 1, kind: input, shape index: {}]
  %s2 = inlined_call_operand.hbm [shape: bf16[128,384], index: 2, kind: input, shape index: {}]
  %s3 = inlined_call_operand.hbm [shape: bf16[256,512], index: 3, kind: input, shape index: {}]
  %s4 = inlined_call_operand.hbm [shape: bf16[512,256], index: 4, kind: input, shape index: {}]
  %s5 = inlined_call_operand.vmem [shape: f32[1,2560], index: 5, kind: input, shape index: {}]
  %s6 = inlined_call_operand.vmem [shape: f32[1,128], index: 6, kind: output, shape index: {}]
  %s7 = sld [smem:[#allocation0]]
  $region46: #{multitask_dal_forward.1} parent=0
    _
  %s9 = ssub.s32 1, %s7
  %s10 = scalar_select 0, %s9, %s7
  $region1: #{multitask_dal_forward.1} parent=0
    #allocation2 [shape = 'u8[98304]{0}', space=vmem, size = 0x18000, scoped, tag = 'input window, operand 2, single buffered']
    #allocation3 [shape = 's32[1]{0}', space=sflag, size = 0x4, scoped, tag = 'scoped memory for multitask_dal_forward.1']
    #allocation4 [shape = 'u8[262144]{0}', space=vmem, size = 0x40000, scoped, tag = 'input window, operand 3, single buffered']
    #allocation5 [shape = 's32[1]{0}', space=sflag, size = 0x4, scoped, tag = 'scoped memory for multitask_dal_forward.1']
    #allocation6 [shape = 'u8[262144]{0}', space=vmem, size = 0x40000, scoped, tag = 'input window, operand 4, single buffered']
    %11 = vsyncpa [#allocation3], 0
    %12 = vsyncpa [#allocation5], 0
    // Predicated region
    $region2: #{multitask_dal_forward.1} parent=1 // pred_check
      _
    $region3: #{multitask_dal_forward.1} parent=1 // pred_check_branch
      %14 = sbr.rel (0) target = $region5
    $region4: #{multitask_dal_forward.1} parent=1 // pred_region
      _
    $region5: #{multitask_dal_forward.1} parent=1 // pred_fallthru
      _
    // Predicated region
    $region6: #{multitask_dal_forward.1} parent=1 // pred_check
      _
    $region7: #{multitask_dal_forward.1} parent=1 // pred_check_branch
      %16 = sbr.rel (0) target = $region9
    $region8: #{multitask_dal_forward.1} parent=1 // pred_region
      _
    $region9: #{multitask_dal_forward.1} parent=1 // pred_fallthru
      _
    // Predicated region
    $region10: #{multitask_dal_forward.1} parent=1 // pred_check
      _
    $region11: #{multitask_dal_forward.1} parent=1 // pred_check_branch
      %18 = sbr.rel (0) target = $region13
    $region12: #{multitask_dal_forward.1} parent=1 // pred_region
      %s20 = ssub.s32 3072, 3072
      %21 = vsyncadd [#allocation3], %s20
      %s22 = sshll.u32 [#allocation2], 4
      %s23 = int_to_ptr.vmem [resolvable:$true] %s22
      %28 = dma.hbm_to_vmem [thread:$0]  %s2, 3072, %s23, [#allocation3], 192, 192, 12
    $region13: #{multitask_dal_forward.1} parent=1 // pred_fallthru
      _
    // Predicated region
    $region14: #{multitask_dal_forward.1} parent=1 // pred_check
      _
    $region15: #{multitask_dal_forward.1} parent=1 // pred_check_branch
      %30 = sbr.rel (0) target = $region17
    $region16: #{multitask_dal_forward.1} parent=1 // pred_region
      %s32 = ssub.s32 8192, 8192
      %33 = vsyncadd [#allocation5], %s32
      %s34 = sshll.u32 [#allocation4], 4
      %s35 = int_to_ptr.vmem [resolvable:$true] %s34
      %40 = dma.hbm_to_vmem [thread:$0]  %s3, 8192, %s35, [#allocation5], 256, 256, 16
    $region17: #{multitask_dal_forward.1} parent=1 // pred_fallthru
      _
    // Predicated region
    $region18: #{multitask_dal_forward.1} parent=1 // pred_check
      _
    $region19: #{multitask_dal_forward.1} parent=1 // pred_check_branch
      %42 = sbr.rel (0) target = $region21
    $region20: #{multitask_dal_forward.1} parent=1 // pred_region
      %s44 = ssub.s32 8192, 8192
      %45 = vsyncadd [#allocation5], %s44
      %s46 = sshll.u32 [#allocation6], 4
      %s47 = int_to_ptr.vmem [resolvable:$true] %s46
      %52 = dma.hbm_to_vmem [thread:$0]  %s4, 8192, %s47, [#allocation5], 128, 128, 8
    $region21: #{multitask_dal_forward.1} parent=1 // pred_fallthru
      _
    // Predicated region
    $region22: #{multitask_dal_forward.1} parent=1 // pred_check
      _
    $region23: #{multitask_dal_forward.1} parent=1 // pred_check_branch
      %54 = sbr.rel (0) target = $region25
    $region24: #{multitask_dal_forward.1} parent=1 // pred_region
      _
    $region25: #{multitask_dal_forward.1} parent=1 // pred_fallthru
      _
    // Predicated region
    $region26: #{multitask_dal_forward.1} parent=1 // pred_check
      _
    $region27: #{multitask_dal_forward.1} parent=1 // pred_check_branch
      %56 = sbr.rel (0) target = $region29
    $region28: #{multitask_dal_forward.1} parent=1 // pred_region
      %57 = dma.done [#allocation3], 3072
    $region29: #{multitask_dal_forward.1} parent=1 // pred_fallthru
      _
    // Predicated region
    $region30: #{multitask_dal_forward.1} parent=1 // pred_check
      _
    $region31: #{multitask_dal_forward.1} parent=1 // pred_check_branch
      %59 = sbr.rel (0) target = $region33
    $region32: #{multitask_dal_forward.1} parent=1 // pred_region
      %60 = dma.done [#allocation5], 8192
    $region33: #{multitask_dal_forward.1} parent=1 // pred_fallthru
      _
    // Predicated region
    $region34: #{multitask_dal_forward.1} parent=1 // pred_check
      _
    $region35: #{multitask_dal_forward.1} parent=1 // pred_check_branch
      %62 = sbr.rel (0) target = $region37
    $region36: #{multitask_dal_forward.1} parent=1 // pred_region
      %63 = dma.done [#allocation5], 8192
    $region37: #{multitask_dal_forward.1} parent=1 // pred_fallthru
      _
    %v65 = vld [vmem:[%s0] sm:$0xff]
    %v66 = vpack.c.bf16 %v65, %v65
    %v67 = vld [vmem:[%s1] sm:$0xff]
    %v68 = vlaneseq
    %v69 = vand.u32 %v68, 127
    %v70 = vld [vmem:[#allocation2] sm:$0xff]
    %v71 = vld [vmem:[#allocation2 + $0xc] sm:$0xff]
    %v72 = vld [vmem:[#allocation2 + $0x18] sm:$0xff]
    %v73 = vld [vmem:[#allocation2 + $0x24] sm:$0xff]
    %v74 = vld [vmem:[#allocation2 + $0x30] sm:$0xff]
    %v75 = vld [vmem:[#allocation2 + $0x3c] sm:$0xff]
    %v76 = vld [vmem:[#allocation2 + $0x48] sm:$0xff]
    %v77 = vld [vmem:[#allocation2 + $0x54] sm:$0xff]
    %v78 = vld [vmem:[#allocation2 + $0x60] sm:$0xff]
    %v79 = vld [vmem:[#allocation2 + $0x6c] sm:$0xff]
    %v80 = vld [vmem:[#allocation2 + $0x78] sm:$0xff]
    %v81 = vld [vmem:[#allocation2 + $0x84] sm:$0xff]
    %v82 = vld [vmem:[#allocation2 + $0x90] sm:$0xff]
    %v83 = vld [vmem:[#allocation2 + $0x9c] sm:$0xff]
    %v84 = vld [vmem:[#allocation2 + $0xa8] sm:$0xff]
    %v85 = vld [vmem:[#allocation2 + $0xb4] sm:$0xff]
    %v86 = vld [vmem:[%s5] sm:$0x3]
    %v88 = vlaneseq
    %v89 = vshrl.u32 %v88, 7
    %v90 = vsub.s32 0, %v89
    %v91 = vrot.slane %v86, %v90
    %v92 = vlaneseq
    %v93 = vshrl.u32 %v92, 7
    %v94 = vsub.s32 1, %v93
    %v95 = vrot.slane %v86, %v94
    %v114 = vunpack.c.l.b16 %v70
    %v115 = vunpack.c.h.b16 %v70
    %v116 = vunpack.c.l.b16 %v71
    %v117 = vunpack.c.h.b16 %v71
    %v118 = vunpack.c.l.b16 %v72
    %v119 = vunpack.c.h.b16 %v72
    %v120 = vunpack.c.l.b16 %v73
    %v121 = vunpack.c.h.b16 %v73
    %v122 = vunpack.c.l.b16 %v74
    %v123 = vunpack.c.h.b16 %v74
    %v124 = vunpack.c.l.b16 %v75
    %v125 = vunpack.c.h.b16 %v75
    %v126 = vunpack.c.l.b16 %v76
    %v127 = vunpack.c.h.b16 %v76
    %v128 = vunpack.c.l.b16 %v77
    %v129 = vunpack.c.h.b16 %v77
    %v130 = vunpack.c.l.b16 %v78
    %v131 = vunpack.c.h.b16 %v78
    %v132 = vunpack.c.l.b16 %v79
    %v133 = vunpack.c.h.b16 %v79
    %v134 = vunpack.c.l.b16 %v80
    %v135 = vunpack.c.h.b16 %v80
    %v136 = vunpack.c.l.b16 %v81
    %v137 = vunpack.c.h.b16 %v81
    %v138 = vunpack.c.l.b16 %v82
    %v139 = vunpack.c.h.b16 %v82
    %v140 = vunpack.c.l.b16 %v83
    %v141 = vunpack.c.h.b16 %v83
    %v142 = vunpack.c.l.b16 %v84
    %v143 = vunpack.c.h.b16 %v84
    %v144 = vunpack.c.l.b16 %v85
    %v145 = vunpack.c.h.b16 %v85
    %v146 = vpack.c.b16 %v116, %v114
    %v147 = vpack.c.b16 %v117, %v115
    %v148 = vpack.c.b16 %v120, %v118
    %v149 = vpack.c.b16 %v121, %v119
    %v150 = vpack.c.b16 %v124, %v122
    %v151 = vpack.c.b16 %v125, %v123
    %v152 = vpack.c.b16 %v128, %v126
    %v153 = vpack.c.b16 %v129, %v127
    %v154 = vpack.c.b16 %v132, %v130
    %v155 = vpack.c.b16 %v133, %v131
    %v156 = vpack.c.b16 %v136, %v134
    %v157 = vpack.c.b16 %v137, %v135
    %v158 = vpack.c.b16 %v140, %v138
    %v159 = vpack.c.b16 %v141, %v139
    %v160 = vpack.c.b16 %v144, %v142
    %v161 = vpack.c.b16 %v145, %v143
    %178 = vmatprep.subr.bf16.mxu0 %v147
    %179 = vmatpush1.bf16.msra.mxu0 %v146
    %180 = vmatprep.subr.bf16.mxu0 %v149
    %181 = vmatpush1.bf16.msra.mxu0 %v148
    %182 = vmatprep.subr.bf16.mxu0 %v151
    %183 = vmatpush1.bf16.msra.mxu0 %v150
    %184 = vmatprep.subr.bf16.mxu0 %v153
    %185 = vmatpush1.bf16.msra.mxu0 %v152
    %186 = vmatprep.subr.bf16.mxu0 %v155
    %187 = vmatpush1.bf16.msra.mxu0 %v154
    %188 = vmatprep.subr.bf16.mxu0 %v157
    %189 = vmatpush1.bf16.msra.mxu0 %v156
    %190 = vmatprep.subr.bf16.mxu0 %v159
    %191 = vmatpush1.bf16.msra.mxu0 %v158
    %192 = vmatprep.subr.bf16.mxu0 %v161
    %193 = vmatpush1.bf16.msra.mxu0 %v160
    %194 = vmatprep.subr.bf16.mxu0 0
    %195 = vmatpush1.bf16.msra.mxu0 0
    %196 = vmatprep.subr.bf16.mxu0 0
    %197 = vmatpush1.bf16.msra.mxu0 0
    %198 = vmatprep.subr.bf16.mxu0 0
    %199 = vmatpush1.bf16.msra.mxu0 0
    %200 = vmatprep.subr.bf16.mxu0 0
    %201 = vmatpush1.bf16.msra.mxu0 0
    %202 = vmatprep.subr.bf16.mxu0 0
    %203 = vmatpush1.bf16.msra.mxu0 0
    %204 = vmatprep.subr.bf16.mxu0 0
    %205 = vmatpush1.bf16.msra.mxu0 0
    %206 = vmatprep.subr.bf16.mxu0 0
    %207 = vmatpush1.bf16.msra.mxu0 0
    %208 = vmatprep.subr.bf16.mxu0 0
    %209 = vmatpush1.bf16.msra.mxu0 0
    %210 = vmatprep.mubr.bf16.mxu0 0
    %211 = vmatmul.mubr.bf16.gmra.mrb[0].mxu0 %v66
    %v212 = vpop.f32.mrb[0].mxu0
    %v213 = vadd.f32 %v91, %v212
    %v214 = vpop.f32.mrb[0].mxu0
    %v215 = vadd.f32 %v95, %v214
    %v216 = vpop.f32.mrb[0].mxu0
    %v217 = vpop.f32.mrb[0].mxu0
    %218 = vdwg.mxu0
    %v219 = vmax.f32 %v213, 0.0
    %v220 = vmax.f32 %v215, 0.0
    %v221 = vsub.f32 %v65, %v219
    %v222 = vsub.f32 %v221, %v220
    %v223 = vmul.f32 %v222, %v222
    %224 = vadd.xlane.f32.xlu0 %v223
    %v225 = vpop.xlane.xlu0 %224
    %v226 = vmax.f32 %v225, 1e-24
    %v227 = vrsqrt.pop %v226
    %v228 = vpack.c.bf16 %v222, %v222
    %v229 = vld [vmem:[#allocation2 + $0x8] sm:$0xf]
    %v230 = vld [vmem:[#allocation2 + $0x14] sm:$0xf]
    %v231 = vld [vmem:[#allocation2 + $0x20] sm:$0xf]
    %v232 = vld [vmem:[#allocation2 + $0x2c] sm:$0xf]
    %v233 = vld [vmem:[#allocation2 + $0x38] sm:$0xf]
    %v234 = vld [vmem:[#allocation2 + $0x44] sm:$0xf]
    %v235 = vld [vmem:[#allocation2 + $0x50] sm:$0xf]
    %v236 = vld [vmem:[#allocation2 + $0x5c] sm:$0xf]
    %v237 = vld [vmem:[#allocation2 + $0x68] sm:$0xf]
    %v238 = vld [vmem:[#allocation2 + $0x74] sm:$0xf]
    %v239 = vld [vmem:[#allocation2 + $0x80] sm:$0xf]
    %v240 = vld [vmem:[#allocation2 + $0x8c] sm:$0xf]
    %v241 = vld [vmem:[#allocation2 + $0x98] sm:$0xf]
    %v242 = vld [vmem:[#allocation2 + $0xa4] sm:$0xf]
    %v243 = vld [vmem:[#allocation2 + $0xb0] sm:$0xf]
    %v244 = vld [vmem:[#allocation2 + $0xbc] sm:$0xf]
    %v261 = vunpack.c.l.b16 %v229
    %v262 = vunpack.c.l.b16 %v230
    %v263 = vunpack.c.l.b16 %v231
    %v264 = vunpack.c.l.b16 %v232
    %v265 = vunpack.c.l.b16 %v233
    %v266 = vunpack.c.l.b16 %v234
    %v267 = vunpack.c.l.b16 %v235
    %v268 = vunpack.c.l.b16 %v236
    %v269 = vunpack.c.l.b16 %v237
    %v270 = vunpack.c.l.b16 %v238
    %v271 = vunpack.c.l.b16 %v239
    %v272 = vunpack.c.l.b16 %v240
    %v273 = vunpack.c.l.b16 %v241
    %v274 = vunpack.c.l.b16 %v242
    %v275 = vunpack.c.l.b16 %v243
    %v276 = vunpack.c.l.b16 %v244
    %v277 = vpack.c.b16 %v262, %v261
    %v278 = vpack.c.b16 %v264, %v263
    %v279 = vpack.c.b16 %v266, %v265
    %v280 = vpack.c.b16 %v268, %v267
    %v281 = vpack.c.b16 %v270, %v269
    %v282 = vpack.c.b16 %v272, %v271
    %v283 = vpack.c.b16 %v274, %v273
    %v284 = vpack.c.b16 %v276, %v275
    %293 = vmatprep.subr.bf16.mxu0 0
    %294 = vmatpush1.bf16.msra.mxu0 %v277
    %295 = vmatprep.subr.bf16.mxu0 0
    %296 = vmatpush1.bf16.msra.mxu0 %v278
    %297 = vmatprep.subr.bf16.mxu0 0
    %298 = vmatpush1.bf16.msra.mxu0 %v279
    %299 = vmatprep.subr.bf16.mxu0 0
    %300 = vmatpush1.bf16.msra.mxu0 %v280
    %301 = vmatprep.subr.bf16.mxu0 0
    %302 = vmatpush1.bf16.msra.mxu0 %v281
    %303 = vmatprep.subr.bf16.mxu0 0
    %304 = vmatpush1.bf16.msra.mxu0 %v282
    %305 = vmatprep.subr.bf16.mxu0 0
    %306 = vmatpush1.bf16.msra.mxu0 %v283
    %307 = vmatprep.subr.bf16.mxu0 0
    %308 = vmatpush1.bf16.msra.mxu0 %v284
    %309 = vmatprep.subr.bf16.mxu0 0
    %310 = vmatpush1.bf16.msra.mxu0 0
    %311 = vmatprep.subr.bf16.mxu0 0
    %312 = vmatpush1.bf16.msra.mxu0 0
    %313 = vmatprep.subr.bf16.mxu0 0
    %314 = vmatpush1.bf16.msra.mxu0 0
    %315 = vmatprep.subr.bf16.mxu0 0
    %316 = vmatpush1.bf16.msra.mxu0 0
    %317 = vmatprep.subr.bf16.mxu0 0
    %318 = vmatpush1.bf16.msra.mxu0 0
    %319 = vmatprep.subr.bf16.mxu0 0
    %320 = vmatpush1.bf16.msra.mxu0 0
    %321 = vmatprep.subr.bf16.mxu0 0
    %322 = vmatpush1.bf16.msra.mxu0 0
    %323 = vmatprep.subr.bf16.mxu0 0
    %324 = vmatpush1.bf16.msra.mxu0 0
    %325 = vmatprep.mubr.bf16.mxu0 0
    %326 = vmatmul.mubr.bf16.gmra.mrb[0].mxu0 %v228
    %v327 = vpop.f32.mrb[0].mxu0
    %v328 = vadd.f32 0.0, %v327
    %v329 = vpop.f32.mrb[0].mxu0
    %v330 = vpop.f32.mrb[0].mxu0
    %v331 = vpop.f32.mrb[0].mxu0
    %332 = vdwg.mxu0
    %v333 = vmul.f32 %v328, %v227
    %v334 = vld [vmem:[%s5 + $0x10] sm:$0x1]
    %v336 = vlaneseq
    %v337 = vshrl.u32 %v336, 7
    %v338 = vsub.s32 0, %v337
    %v339 = vrot.slane %v334, %v338
    %v341 = vmul.f32 %v333, %v339
    %342 = vset.pattern.permute.xlu0 0
    %343 = vperm.xlu0 %342, %v67
    %v344 = vpop.permute.xlu0 %343
    %vm345 = vcmp.eq.s32.totalorder %v69, %v344
    %v346 = vsel %vm345, 1, 0
    %v347 = vcvt.s32.f32 %v346
    %v348 = vmul.f32 %v347, 0.35
    %v349 = vsub.f32 %v341, %v348
    %v350 = vmul.f32 %v349, 64.0
    %351 = vmax.xlane.f32.xlu0 %v350
    %v352 = vpop.xlane.xlu0 %351
    %v353 = vsub.f32 %v350, %v352
    %v354 = vmul.f32 %v353, 1.442695
    %v355 = vpow.pop %v354
    %356 = vadd.xlane.f32.xlu0 %v355
    %v357 = vpop.xlane.xlu0 %356
    %v358 = vlog2.pop %v357
    %v359 = vmul.f32 %v358, 0.6931472
    %v360 = vadd.f32 %v359, %v352
    %v361 = vmul.f32 %v350, %v347
    %362 = vadd.xlane.f32.xlu0 %v361
    %v363 = vpop.xlane.xlu0 %362
    %v364 = vsub.f32 %v360, %v363
    %v365 = vrot.slane %v364, 4
    %v366 = vadd.f32 %v364, %v365
    %v367 = vrot.slane %v366, 2
    %v368 = vadd.f32 %v366, %v367
    %v369 = vrot.slane %v368, 1
    %v370 = vadd.f32 %v368, %v369
    %v371 = vmul.f32 %v370, 0.125
    %vm372 = vcmp.ge.f32.partialorder %v363, %v352
    %v373 = vsel %vm372, 1, 0
    %v374 = vcvt.s32.f32 %v373
    %v375 = vrot.slane %v374, 4
    %v376 = vadd.f32 %v374, %v375
    %v377 = vrot.slane %v376, 2
    %v378 = vadd.f32 %v376, %v377
    %v379 = vrot.slane %v378, 1
    %v380 = vadd.f32 %v378, %v379
    %v381 = vmul.f32 %v380, 0.125
    %v382 = vpack.c.bf16 %v219, %v219
    %v383 = vpack.c.bf16 %v220, %v220
    %v384 = vld [vmem:[#allocation4] sm:$0xff]
    %v385 = vld [vmem:[#allocation4 + $0x8] sm:$0xff]
    %v386 = vld [vmem:[#allocation4 + $0x10] sm:$0xff]
    %v387 = vld [vmem:[#allocation4 + $0x18] sm:$0xff]
    %v388 = vld [vmem:[#allocation4 + $0x20] sm:$0xff]
    %v389 = vld [vmem:[#allocation4 + $0x28] sm:$0xff]
    %v390 = vld [vmem:[#allocation4 + $0x30] sm:$0xff]
    %v391 = vld [vmem:[#allocation4 + $0x38] sm:$0xff]
    %v392 = vld [vmem:[#allocation4 + $0x40] sm:$0xff]
    %v393 = vld [vmem:[#allocation4 + $0x48] sm:$0xff]
    %v394 = vld [vmem:[#allocation4 + $0x50] sm:$0xff]
    %v395 = vld [vmem:[#allocation4 + $0x58] sm:$0xff]
    %v396 = vld [vmem:[#allocation4 + $0x60] sm:$0xff]
    %v397 = vld [vmem:[#allocation4 + $0x68] sm:$0xff]
    %v398 = vld [vmem:[#allocation4 + $0x70] sm:$0xff]
    %v399 = vld [vmem:[#allocation4 + $0x78] sm:$0xff]
    %v400 = vld [vmem:[#allocation4 + $0x80] sm:$0xff]
    %v401 = vld [vmem:[#allocation4 + $0x88] sm:$0xff]
    %v402 = vld [vmem:[#allocation4 + $0x90] sm:$0xff]
    %v403 = vld [vmem:[#allocation4 + $0x98] sm:$0xff]
    %v404 = vld [vmem:[#allocation4 + $0xa0] sm:$0xff]
    %v405 = vld [vmem:[#allocation4 + $0xa8] sm:$0xff]
    %v406 = vld [vmem:[#allocation4 + $0xb0] sm:$0xff]
    %v407 = vld [vmem:[#allocation4 + $0xb8] sm:$0xff]
    %v408 = vld [vmem:[#allocation4 + $0xc0] sm:$0xff]
    %v409 = vld [vmem:[#allocation4 + $0xc8] sm:$0xff]
    %v410 = vld [vmem:[#allocation4 + $0xd0] sm:$0xff]
    %v411 = vld [vmem:[#allocation4 + $0xd8] sm:$0xff]
    %v412 = vld [vmem:[#allocation4 + $0xe0] sm:$0xff]
    %v413 = vld [vmem:[#allocation4 + $0xe8] sm:$0xff]
    %v414 = vld [vmem:[#allocation4 + $0xf0] sm:$0xff]
    %v415 = vld [vmem:[#allocation4 + $0xf8] sm:$0xff]
    %v416 = vld [vmem:[#allocation4 + $0x100] sm:$0xff]
    %v417 = vld [vmem:[#allocation4 + $0x108] sm:$0xff]
    %v418 = vld [vmem:[#allocation4 + $0x110] sm:$0xff]
    %v419 = vld [vmem:[#allocation4 + $0x118] sm:$0xff]
    %v420 = vld [vmem:[#allocation4 + $0x120] sm:$0xff]
    %v421 = vld [vmem:[#allocation4 + $0x128] sm:$0xff]
    %v422 = vld [vmem:[#allocation4 + $0x130] sm:$0xff]
    %v423 = vld [vmem:[#allocation4 + $0x138] sm:$0xff]
    %v424 = vld [vmem:[#allocation4 + $0x140] sm:$0xff]
    %v425 = vld [vmem:[#allocation4 + $0x148] sm:$0xff]
    %v426 = vld [vmem:[#allocation4 + $0x150] sm:$0xff]
    %v427 = vld [vmem:[#allocation4 + $0x158] sm:$0xff]
    %v428 = vld [vmem:[#allocation4 + $0x160] sm:$0xff]
    %v429 = vld [vmem:[#allocation4 + $0x168] sm:$0xff]
    %v430 = vld [vmem:[#allocation4 + $0x170] sm:$0xff]
    %v431 = vld [vmem:[#allocation4 + $0x178] sm:$0xff]
    %v432 = vld [vmem:[#allocation4 + $0x180] sm:$0xff]
    %v433 = vld [vmem:[#allocation4 + $0x188] sm:$0xff]
    %v434 = vld [vmem:[#allocation4 + $0x190] sm:$0xff]
    %v435 = vld [vmem:[#allocation4 + $0x198] sm:$0xff]
    %v436 = vld [vmem:[#allocation4 + $0x1a0] sm:$0xff]
    %v437 = vld [vmem:[#allocation4 + $0x1a8] sm:$0xff]
    %v438 = vld [vmem:[#allocation4 + $0x1b0] sm:$0xff]
    %v439 = vld [vmem:[#allocation4 + $0x1b8] sm:$0xff]
    %v440 = vld [vmem:[#allocation4 + $0x1c0] sm:$0xff]
    %v441 = vld [vmem:[#allocation4 + $0x1c8] sm:$0xff]
    %v442 = vld [vmem:[#allocation4 + $0x1d0] sm:$0xff]
    %v443 = vld [vmem:[#allocation4 + $0x1d8] sm:$0xff]
    %v444 = vld [vmem:[#allocation4 + $0x1e0] sm:$0xff]
    %v445 = vld [vmem:[#allocation4 + $0x1e8] sm:$0xff]
    %v446 = vld [vmem:[#allocation4 + $0x1f0] sm:$0xff]
    %v447 = vld [vmem:[#allocation4 + $0x1f8] sm:$0xff]
    %v448 = vld [vmem:[%s5 + $0x2] sm:$0xf]
    %v450 = vlaneseq
    %v451 = vshrl.u32 %v450, 7
    %v452 = vsub.s32 0, %v451
    %v453 = vrot.slane %v448, %v452
    %v454 = vlaneseq
    %v455 = vshrl.u32 %v454, 7
    %v456 = vsub.s32 1, %v455
    %v457 = vrot.slane %v448, %v456
    %v458 = vlaneseq
    %v459 = vshrl.u32 %v458, 7
    %v460 = vsub.s32 2, %v459
    %v461 = vrot.slane %v448, %v460
    %v462 = vlaneseq
    %v463 = vshrl.u32 %v462, 7
    %v464 = vsub.s32 3, %v463
    %v465 = vrot.slane %v448, %v464
    %v534 = vunpack.c.l.b16 %v384
    %v535 = vunpack.c.h.b16 %v384
    %v536 = vunpack.c.l.b16 %v385
    %v537 = vunpack.c.h.b16 %v385
    %v538 = vunpack.c.l.b16 %v386
    %v539 = vunpack.c.h.b16 %v386
    %v540 = vunpack.c.l.b16 %v387
    %v541 = vunpack.c.h.b16 %v387
    %v542 = vunpack.c.l.b16 %v388
    %v543 = vunpack.c.h.b16 %v388
    %v544 = vunpack.c.l.b16 %v389
    %v545 = vunpack.c.h.b16 %v389
    %v546 = vunpack.c.l.b16 %v390
    %v547 = vunpack.c.h.b16 %v390
    %v548 = vunpack.c.l.b16 %v391
    %v549 = vunpack.c.h.b16 %v391
    %v550 = vunpack.c.l.b16 %v392
    %v551 = vunpack.c.h.b16 %v392
    %v552 = vunpack.c.l.b16 %v393
    %v553 = vunpack.c.h.b16 %v393
    %v554 = vunpack.c.l.b16 %v394
    %v555 = vunpack.c.h.b16 %v394
    %v556 = vunpack.c.l.b16 %v395
    %v557 = vunpack.c.h.b16 %v395
    %v558 = vunpack.c.l.b16 %v396
    %v559 = vunpack.c.h.b16 %v396
    %v560 = vunpack.c.l.b16 %v397
    %v561 = vunpack.c.h.b16 %v397
    %v562 = vunpack.c.l.b16 %v398
    %v563 = vunpack.c.h.b16 %v398
    %v564 = vunpack.c.l.b16 %v399
    %v565 = vunpack.c.h.b16 %v399
    %v566 = vunpack.c.l.b16 %v400
    %v567 = vunpack.c.h.b16 %v400
    %v568 = vunpack.c.l.b16 %v401
    %v569 = vunpack.c.h.b16 %v401
    %v570 = vunpack.c.l.b16 %v402
    %v571 = vunpack.c.h.b16 %v402
    %v572 = vunpack.c.l.b16 %v403
    %v573 = vunpack.c.h.b16 %v403
    %v574 = vunpack.c.l.b16 %v404
    %v575 = vunpack.c.h.b16 %v404
    %v576 = vunpack.c.l.b16 %v405
    %v577 = vunpack.c.h.b16 %v405
    %v578 = vunpack.c.l.b16 %v406
    %v579 = vunpack.c.h.b16 %v406
    %v580 = vunpack.c.l.b16 %v407
    %v581 = vunpack.c.h.b16 %v407
    %v582 = vunpack.c.l.b16 %v408
    %v583 = vunpack.c.h.b16 %v408
    %v584 = vunpack.c.l.b16 %v409
    %v585 = vunpack.c.h.b16 %v409
    %v586 = vunpack.c.l.b16 %v410
    %v587 = vunpack.c.h.b16 %v410
    %v588 = vunpack.c.l.b16 %v411
    %v589 = vunpack.c.h.b16 %v411
    %v590 = vunpack.c.l.b16 %v412
    %v591 = vunpack.c.h.b16 %v412
    %v592 = vunpack.c.l.b16 %v413
    %v593 = vunpack.c.h.b16 %v413
    %v594 = vunpack.c.l.b16 %v414
    %v595 = vunpack.c.h.b16 %v414
    %v596 = vunpack.c.l.b16 %v415
    %v597 = vunpack.c.h.b16 %v415
    %v598 = vunpack.c.l.b16 %v416
    %v599 = vunpack.c.h.b16 %v416
    %v600 = vunpack.c.l.b16 %v417
    %v601 = vunpack.c.h.b16 %v417
    %v602 = vunpack.c.l.b16 %v418
    %v603 = vunpack.c.h.b16 %v418
    %v604 = vunpack.c.l.b16 %v419
    %v605 = vunpack.c.h.b16 %v419
    %v606 = vunpack.c.l.b16 %v420
    %v607 = vunpack.c.h.b16 %v420
    %v608 = vunpack.c.l.b16 %v421
    %v609 = vunpack.c.h.b16 %v421
    %v610 = vunpack.c.l.b16 %v422
    %v611 = vunpack.c.h.b16 %v422
    %v612 = vunpack.c.l.b16 %v423
    %v613 = vunpack.c.h.b16 %v423
    %v614 = vunpack.c.l.b16 %v424
    %v615 = vunpack.c.h.b16 %v424
    %v616 = vunpack.c.l.b16 %v425
    %v617 = vunpack.c.h.b16 %v425
    %v618 = vunpack.c.l.b16 %v426
    %v619 = vunpack.c.h.b16 %v426
    %v620 = vunpack.c.l.b16 %v427
    %v621 = vunpack.c.h.b16 %v427
    %v622 = vunpack.c.l.b16 %v428
    %v623 = vunpack.c.h.b16 %v428
    %v624 = vunpack.c.l.b16 %v429
    %v625 = vunpack.c.h.b16 %v429
    %v626 = vunpack.c.l.b16 %v430
    %v627 = vunpack.c.h.b16 %v430
    %v628 = vunpack.c.l.b16 %v431
    %v629 = vunpack.c.h.b16 %v431
    %v630 = vunpack.c.l.b16 %v432
    %v631 = vunpack.c.h.b16 %v432
    %v632 = vunpack.c.l.b16 %v433
    %v633 = vunpack.c.h.b16 %v433
    %v634 = vunpack.c.l.b16 %v434
    %v635 = vunpack.c.h.b16 %v434
    %v636 = vunpack.c.l.b16 %v435
    %v637 = vunpack.c.h.b16 %v435
    %v638 = vunpack.c.l.b16 %v436
    %v639 = vunpack.c.h.b16 %v436
    %v640 = vunpack.c.l.b16 %v437
    %v641 = vunpack.c.h.b16 %v437
    %v642 = vunpack.c.l.b16 %v438
    %v643 = vunpack.c.h.b16 %v438
    %v644 = vunpack.c.l.b16 %v439
    %v645 = vunpack.c.h.b16 %v439
    %v646 = vunpack.c.l.b16 %v440
    %v647 = vunpack.c.h.b16 %v440
    %v648 = vunpack.c.l.b16 %v441
    %v649 = vunpack.c.h.b16 %v441
    %v650 = vunpack.c.l.b16 %v442
    %v651 = vunpack.c.h.b16 %v442
    %v652 = vunpack.c.l.b16 %v443
    %v653 = vunpack.c.h.b16 %v443
    %v654 = vunpack.c.l.b16 %v444
    %v655 = vunpack.c.h.b16 %v444
    %v656 = vunpack.c.l.b16 %v445
    %v657 = vunpack.c.h.b16 %v445
    %v658 = vunpack.c.l.b16 %v446
    %v659 = vunpack.c.h.b16 %v446
    %v660 = vunpack.c.l.b16 %v447
    %v661 = vunpack.c.h.b16 %v447
    %v662 = vpack.c.b16 %v538, %v534
    %v663 = vpack.c.b16 %v539, %v535
    %v664 = vpack.c.b16 %v540, %v536
    %v665 = vpack.c.b16 %v541, %v537
    %v666 = vpack.c.b16 %v546, %v542
    %v667 = vpack.c.b16 %v547, %v543
    %v668 = vpack.c.b16 %v548, %v544
    %v669 = vpack.c.b16 %v549, %v545
    %v670 = vpack.c.b16 %v554, %v550
    %v671 = vpack.c.b16 %v555, %v551
    %v672 = vpack.c.b16 %v556, %v552
    %v673 = vpack.c.b16 %v557, %v553
    %v674 = vpack.c.b16 %v562, %v558
    %v675 = vpack.c.b16 %v563, %v559
    %v676 = vpack.c.b16 %v564, %v560
    %v677 = vpack.c.b16 %v565, %v561
    %v678 = vpack.c.b16 %v570, %v566
    %v679 = vpack.c.b16 %v571, %v567
    %v680 = vpack.c.b16 %v572, %v568
    %v681 = vpack.c.b16 %v573, %v569
    %v682 = vpack.c.b16 %v578, %v574
    %v683 = vpack.c.b16 %v579, %v575
    %v684 = vpack.c.b16 %v580, %v576
    %v685 = vpack.c.b16 %v581, %v577
    %v686 = vpack.c.b16 %v586, %v582
    %v687 = vpack.c.b16 %v587, %v583
    %v688 = vpack.c.b16 %v588, %v584
    %v689 = vpack.c.b16 %v589, %v585
    %v690 = vpack.c.b16 %v594, %v590
    %v691 = vpack.c.b16 %v595, %v591
    %v692 = vpack.c.b16 %v596, %v592
    %v693 = vpack.c.b16 %v597, %v593
    %v694 = vpack.c.b16 %v602, %v598
    %v695 = vpack.c.b16 %v603, %v599
    %v696 = vpack.c.b16 %v604, %v600
    %v697 = vpack.c.b16 %v605, %v601
    %v698 = vpack.c.b16 %v610, %v606
    %v699 = vpack.c.b16 %v611, %v607
    %v700 = vpack.c.b16 %v612, %v608
    %v701 = vpack.c.b16 %v613, %v609
    %v702 = vpack.c.b16 %v618, %v614
    %v703 = vpack.c.b16 %v619, %v615
    %v704 = vpack.c.b16 %v620, %v616
    %v705 = vpack.c.b16 %v621, %v617
    %v706 = vpack.c.b16 %v626, %v622
    %v707 = vpack.c.b16 %v627, %v623
    %v708 = vpack.c.b16 %v628, %v624
    %v709 = vpack.c.b16 %v629, %v625
    %v710 = vpack.c.b16 %v634, %v630
    %v711 = vpack.c.b16 %v635, %v631
    %v712 = vpack.c.b16 %v636, %v632
    %v713 = vpack.c.b16 %v637, %v633
    %v714 = vpack.c.b16 %v642, %v638
    %v715 = vpack.c.b16 %v643, %v639
    %v716 = vpack.c.b16 %v644, %v640
    %v717 = vpack.c.b16 %v645, %v641
    %v718 = vpack.c.b16 %v650, %v646
    %v719 = vpack.c.b16 %v651, %v647
    %v720 = vpack.c.b16 %v652, %v648
    %v721 = vpack.c.b16 %v653, %v649
    %v722 = vpack.c.b16 %v658, %v654
    %v723 = vpack.c.b16 %v659, %v655
    %v724 = vpack.c.b16 %v660, %v656
    %v725 = vpack.c.b16 %v661, %v657
    %790 = vmatprep.subr.bf16.mxu0 %v663
    %791 = vmatpush1.bf16.msra.mxu0 %v662
    %792 = vmatprep.subr.bf16.mxu0 %v667
    %793 = vmatpush1.bf16.msra.mxu0 %v666
    %794 = vmatprep.subr.bf16.mxu0 %v671
    %795 = vmatpush1.bf16.msra.mxu0 %v670
    %796 = vmatprep.subr.bf16.mxu0 %v675
    %797 = vmatpush1.bf16.msra.mxu0 %v674
    %798 = vmatprep.subr.bf16.mxu0 %v679
    %799 = vmatpush1.bf16.msra.mxu0 %v678
    %800 = vmatprep.subr.bf16.mxu0 %v683
    %801 = vmatpush1.bf16.msra.mxu0 %v682
    %802 = vmatprep.subr.bf16.mxu0 %v687
    %803 = vmatpush1.bf16.msra.mxu0 %v686
    %804 = vmatprep.subr.bf16.mxu0 %v691
    %805 = vmatpush1.bf16.msra.mxu0 %v690
    %806 = vmatprep.subr.bf16.mxu0 %v695
    %807 = vmatpush1.bf16.msra.mxu0 %v694
    %808 = vmatprep.subr.bf16.mxu0 %v699
    %809 = vmatpush1.bf16.msra.mxu0 %v698
    %810 = vmatprep.subr.bf16.mxu0 %v703
    %811 = vmatpush1.bf16.msra.mxu0 %v702
    %812 = vmatprep.subr.bf16.mxu0 %v707
    %813 = vmatpush1.bf16.msra.mxu0 %v706
    %814 = vmatprep.subr.bf16.mxu0 %v711
    %815 = vmatpush1.bf16.msra.mxu0 %v710
    %816 = vmatprep.subr.bf16.mxu0 %v715
    %817 = vmatpush1.bf16.msra.mxu0 %v714
    %818 = vmatprep.subr.bf16.mxu0 %v719
    %819 = vmatpush1.bf16.msra.mxu0 %v718
    %820 = vmatprep.subr.bf16.mxu0 %v723
    %821 = vmatpush1.bf16.msra.mxu0 %v722
    %822 = vmatprep.mubr.bf16.mxu0 %v383
    %823 = vmatmul.mubr.bf16.gmra.mrb[0].mxu0 %v382
    %v824 = vpop.f32.mrb[0].mxu0
    %v825 = vadd.f32 %v453, %v824
    %v826 = vpop.f32.mrb[0].mxu0
    %v827 = vadd.f32 %v457, %v826
    %v828 = vpop.f32.mrb[0].mxu0
    %v829 = vpop.f32.mrb[0].mxu0
    %830 = vdwg.mxu0
    %831 = vmatprep.subr.bf16.mxu0 %v665
    %832 = vmatpush1.bf16.msra.mxu0 %v664
    %833 = vmatprep.subr.bf16.mxu0 %v669
    %834 = vmatpush1.bf16.msra.mxu0 %v668
    %835 = vmatprep.subr.bf16.mxu0 %v673
    %836 = vmatpush1.bf16.msra.mxu0 %v672
    %837 = vmatprep.subr.bf16.mxu0 %v677
    %838 = vmatpush1.bf16.msra.mxu0 %v676
    %839 = vmatprep.subr.bf16.mxu0 %v681
    %840 = vmatpush1.bf16.msra.mxu0 %v680
    %841 = vmatprep.subr.bf16.mxu0 %v685
    %842 = vmatpush1.bf16.msra.mxu0 %v684
    %843 = vmatprep.subr.bf16.mxu0 %v689
    %844 = vmatpush1.bf16.msra.mxu0 %v688
    %845 = vmatprep.subr.bf16.mxu0 %v693
    %846 = vmatpush1.bf16.msra.mxu0 %v692
    %847 = vmatprep.subr.bf16.mxu0 %v697
    %848 = vmatpush1.bf16.msra.mxu0 %v696
    %849 = vmatprep.subr.bf16.mxu0 %v701
    %850 = vmatpush1.bf16.msra.mxu0 %v700
    %851 = vmatprep.subr.bf16.mxu0 %v705
    %852 = vmatpush1.bf16.msra.mxu0 %v704
    %853 = vmatprep.subr.bf16.mxu0 %v709
    %854 = vmatpush1.bf16.msra.mxu0 %v708
    %855 = vmatprep.subr.bf16.mxu0 %v713
    %856 = vmatpush1.bf16.msra.mxu0 %v712
    %857 = vmatprep.subr.bf16.mxu0 %v717
    %858 = vmatpush1.bf16.msra.mxu0 %v716
    %859 = vmatprep.subr.bf16.mxu0 %v721
    %860 = vmatpush1.bf16.msra.mxu0 %v720
    %861 = vmatprep.subr.bf16.mxu0 %v725
    %862 = vmatpush1.bf16.msra.mxu0 %v724
    %863 = vmatprep.mubr.bf16.mxu0 %v383
    %864 = vmatmul.mubr.bf16.gmra.mrb[0].mxu0 %v382
    %v865 = vpop.f32.mrb[0].mxu0
    %v866 = vadd.f32 %v461, %v865
    %v867 = vpop.f32.mrb[0].mxu0
    %v868 = vadd.f32 %v465, %v867
    %v869 = vpop.f32.mrb[0].mxu0
    %v870 = vpop.f32.mrb[0].mxu0
    %871 = vdwg.mxu0
    %v872 = vrot.slane %v825, 4
    %v873 = vadd.f32 %v825, %v872
    %v874 = vrot.slane %v873, 2
    %v875 = vadd.f32 %v873, %v874
    %v876 = vrot.slane %v875, 1
    %v877 = vadd.f32 %v875, %v876
    %v878 = vrot.slane %v827, 4
    %v879 = vadd.f32 %v827, %v878
    %v880 = vrot.slane %v879, 2
    %v881 = vadd.f32 %v879, %v880
    %v882 = vrot.slane %v881, 1
    %v883 = vadd.f32 %v881, %v882
    %v884 = vrot.slane %v866, 4
    %v885 = vadd.f32 %v866, %v884
    %v886 = vrot.slane %v885, 2
    %v887 = vadd.f32 %v885, %v886
    %v888 = vrot.slane %v887, 1
    %v889 = vadd.f32 %v887, %v888
    %v890 = vrot.slane %v868, 4
    %v891 = vadd.f32 %v868, %v890
    %v892 = vrot.slane %v891, 2
    %v893 = vadd.f32 %v891, %v892
    %v894 = vrot.slane %v893, 1
    %v895 = vadd.f32 %v893, %v894
    %v896 = vrcp.pop 8.0
    %v897 = vmul.f32 %v877, %v896
    %v898 = vmul.f32 %v883, %v896
    %v899 = vmul.f32 %v889, %v896
    %v900 = vmul.f32 %v895, %v896
    %v901 = vsub.f32 %v825, %v897
    %v902 = vsub.f32 %v827, %v898
    %v903 = vsub.f32 %v866, %v899
    %v904 = vsub.f32 %v868, %v900
    %v905 = vmul.f32 %v901, %v901
    %v906 = vmul.f32 %v902, %v902
    %v907 = vmul.f32 %v903, %v903
    %v908 = vmul.f32 %v904, %v904
    %v909 = vrot.slane %v905, 4
    %v910 = vadd.f32 %v905, %v909
    %v911 = vrot.slane %v910, 2
    %v912 = vadd.f32 %v910, %v911
    %v913 = vrot.slane %v912, 1
    %v914 = vadd.f32 %v912, %v913
    %v915 = vrot.slane %v906, 4
    %v916 = vadd.f32 %v906, %v915
    %v917 = vrot.slane %v916, 2
    %v918 = vadd.f32 %v916, %v917
    %v919 = vrot.slane %v918, 1
    %v920 = vadd.f32 %v918, %v919
    %v921 = vrot.slane %v907, 4
    %v922 = vadd.f32 %v907, %v921
    %v923 = vrot.slane %v922, 2
    %v924 = vadd.f32 %v922, %v923
    %v925 = vrot.slane %v924, 1
    %v926 = vadd.f32 %v924, %v925
    %v927 = vrot.slane %v908, 4
    %v928 = vadd.f32 %v908, %v927
    %v929 = vrot.slane %v928, 2
    %v930 = vadd.f32 %v928, %v929
    %v931 = vrot.slane %v930, 1
    %v932 = vadd.f32 %v930, %v931
    %v933 = vmul.f32 %v914, %v896
    %v934 = vmul.f32 %v920, %v896
    %v935 = vmul.f32 %v926, %v896
    %v936 = vmul.f32 %v932, %v896
    %v937 = vadd.f32 %v933, 1e-05
    %v938 = vadd.f32 %v934, 1e-05
    %v939 = vadd.f32 %v935, 1e-05
    %v940 = vadd.f32 %v936, 1e-05
    %v941 = vrsqrt.pop %v937
    %v942 = vrsqrt.pop %v938
    %v943 = vrsqrt.pop %v939
    %v944 = vrsqrt.pop %v940
    %v945 = vmul.f32 %v901, %v941
    %v946 = vmul.f32 %v902, %v942
    %v947 = vmul.f32 %v903, %v943
    %v948 = vmul.f32 %v904, %v944
    %v949 = vld [vmem:[%s5 + $0x6] sm:$0xf]
    %v951 = vlaneseq
    %v952 = vshrl.u32 %v951, 7
    %v953 = vsub.s32 0, %v952
    %v954 = vrot.slane %v949, %v953
    %v955 = vlaneseq
    %v956 = vshrl.u32 %v955, 7
    %v957 = vsub.s32 1, %v956
    %v958 = vrot.slane %v949, %v957
    %v959 = vlaneseq
    %v960 = vshrl.u32 %v959, 7
    %v961 = vsub.s32 2, %v960
    %v962 = vrot.slane %v949, %v961
    %v963 = vlaneseq
    %v964 = vshrl.u32 %v963, 7
    %v965 = vsub.s32 3, %v964
    %v966 = vrot.slane %v949, %v965
    %v971 = vmul.f32 %v945, %v954
    %v972 = vmul.f32 %v946, %v958
    %v973 = vmul.f32 %v947, %v962
    %v974 = vmul.f32 %v948, %v966
    %v975 = vld [vmem:[%s5 + $0xa] sm:$0xf]
    %v977 = vlaneseq
    %v978 = vshrl.u32 %v977, 7
    %v979 = vsub.s32 0, %v978
    %v980 = vrot.slane %v975, %v979
    %v981 = vlaneseq
    %v982 = vshrl.u32 %v981, 7
    %v983 = vsub.s32 1, %v982
    %v984 = vrot.slane %v975, %v983
    %v985 = vlaneseq
    %v986 = vshrl.u32 %v985, 7
    %v987 = vsub.s32 2, %v986
    %v988 = vrot.slane %v975, %v987
    %v989 = vlaneseq
    %v990 = vshrl.u32 %v989, 7
    %v991 = vsub.s32 3, %v990
    %v992 = vrot.slane %v975, %v991
    %v997 = vadd.f32 %v971, %v980
    %v998 = vadd.f32 %v972, %v984
    %v999 = vadd.f32 %v973, %v988
    %v1000 = vadd.f32 %v974, %v992
    %v1001 = vmax.f32 %v997, 0.0
    %v1002 = vmax.f32 %v998, 0.0
    %v1003 = vmax.f32 %v999, 0.0
    %v1004 = vmax.f32 %v1000, 0.0
    %v1005 = vpack.c.bf16 %v1001, %v1001
    %v1006 = vpack.c.bf16 %v1002, %v1002
    %v1007 = vpack.c.bf16 %v1003, %v1003
    %v1008 = vpack.c.bf16 %v1004, %v1004
    %v1009 = vld [vmem:[#allocation6] sm:$0xff]
    %v1010 = vld [vmem:[#allocation6 + $0x8] sm:$0xff]
    %v1011 = vld [vmem:[#allocation6 + $0x10] sm:$0xff]
    %v1012 = vld [vmem:[#allocation6 + $0x18] sm:$0xff]
    %v1013 = vld [vmem:[#allocation6 + $0x20] sm:$0xff]
    %v1014 = vld [vmem:[#allocation6 + $0x28] sm:$0xff]
    %v1015 = vld [vmem:[#allocation6 + $0x30] sm:$0xff]
    %v1016 = vld [vmem:[#allocation6 + $0x38] sm:$0xff]
    %v1017 = vld [vmem:[#allocation6 + $0x40] sm:$0xff]
    %v1018 = vld [vmem:[#allocation6 + $0x48] sm:$0xff]
    %v1019 = vld [vmem:[#allocation6 + $0x50] sm:$0xff]
    %v1020 = vld [vmem:[#allocation6 + $0x58] sm:$0xff]
    %v1021 = vld [vmem:[#allocation6 + $0x60] sm:$0xff]
    %v1022 = vld [vmem:[#allocation6 + $0x68] sm:$0xff]
    %v1023 = vld [vmem:[#allocation6 + $0x70] sm:$0xff]
    %v1024 = vld [vmem:[#allocation6 + $0x78] sm:$0xff]
    %v1025 = vld [vmem:[#allocation6 + $0x80] sm:$0xff]
    %v1026 = vld [vmem:[#allocation6 + $0x88] sm:$0xff]
    %v1027 = vld [vmem:[#allocation6 + $0x90] sm:$0xff]
    %v1028 = vld [vmem:[#allocation6 + $0x98] sm:$0xff]
    %v1029 = vld [vmem:[#allocation6 + $0xa0] sm:$0xff]
    %v1030 = vld [vmem:[#allocation6 + $0xa8] sm:$0xff]
    %v1031 = vld [vmem:[#allocation6 + $0xb0] sm:$0xff]
    %v1032 = vld [vmem:[#allocation6 + $0xb8] sm:$0xff]
    %v1033 = vld [vmem:[#allocation6 + $0xc0] sm:$0xff]
    %v1034 = vld [vmem:[#allocation6 + $0xc8] sm:$0xff]
    %v1035 = vld [vmem:[#allocation6 + $0xd0] sm:$0xff]
    %v1036 = vld [vmem:[#allocation6 + $0xd8] sm:$0xff]
    %v1037 = vld [vmem:[#allocation6 + $0xe0] sm:$0xff]
    %v1038 = vld [vmem:[#allocation6 + $0xe8] sm:$0xff]
    %v1039 = vld [vmem:[#allocation6 + $0xf0] sm:$0xff]
    %v1040 = vld [vmem:[#allocation6 + $0xf8] sm:$0xff]
    %v1041 = vld [vmem:[#allocation6 + $0x100] sm:$0xff]
    %v1042 = vld [vmem:[#allocation6 + $0x108] sm:$0xff]
    %v1043 = vld [vmem:[#allocation6 + $0x110] sm:$0xff]
    %v1044 = vld [vmem:[#allocation6 + $0x118] sm:$0xff]
    %v1045 = vld [vmem:[#allocation6 + $0x120] sm:$0xff]
    %v1046 = vld [vmem:[#allocation6 + $0x128] sm:$0xff]
    %v1047 = vld [vmem:[#allocation6 + $0x130] sm:$0xff]
    %v1048 = vld [vmem:[#allocation6 + $0x138] sm:$0xff]
    %v1049 = vld [vmem:[#allocation6 + $0x140] sm:$0xff]
    %v1050 = vld [vmem:[#allocation6 + $0x148] sm:$0xff]
    %v1051 = vld [vmem:[#allocation6 + $0x150] sm:$0xff]
    %v1052 = vld [vmem:[#allocation6 + $0x158] sm:$0xff]
    %v1053 = vld [vmem:[#allocation6 + $0x160] sm:$0xff]
    %v1054 = vld [vmem:[#allocation6 + $0x168] sm:$0xff]
    %v1055 = vld [vmem:[#allocation6 + $0x170] sm:$0xff]
    %v1056 = vld [vmem:[#allocation6 + $0x178] sm:$0xff]
    %v1057 = vld [vmem:[#allocation6 + $0x180] sm:$0xff]
    %v1058 = vld [vmem:[#allocation6 + $0x188] sm:$0xff]
    %v1059 = vld [vmem:[#allocation6 + $0x190] sm:$0xff]
    %v1060 = vld [vmem:[#allocation6 + $0x198] sm:$0xff]
    %v1061 = vld [vmem:[#allocation6 + $0x1a0] sm:$0xff]
    %v1062 = vld [vmem:[#allocation6 + $0x1a8] sm:$0xff]
    %v1063 = vld [vmem:[#allocation6 + $0x1b0] sm:$0xff]
    %v1064 = vld [vmem:[#allocation6 + $0x1b8] sm:$0xff]
    %v1065 = vld [vmem:[#allocation6 + $0x1c0] sm:$0xff]
    %v1066 = vld [vmem:[#allocation6 + $0x1c8] sm:$0xff]
    %v1067 = vld [vmem:[#allocation6 + $0x1d0] sm:$0xff]
    %v1068 = vld [vmem:[#allocation6 + $0x1d8] sm:$0xff]
    %v1069 = vld [vmem:[#allocation6 + $0x1e0] sm:$0xff]
    %v1070 = vld [vmem:[#allocation6 + $0x1e8] sm:$0xff]
    %v1071 = vld [vmem:[#allocation6 + $0x1f0] sm:$0xff]
    %v1072 = vld [vmem:[#allocation6 + $0x1f8] sm:$0xff]
    %v1073 = vld [vmem:[%s5 + $0xe] sm:$0x3]
    %v1075 = vlaneseq
    %v1076 = vshrl.u32 %v1075, 7
    %v1077 = vsub.s32 0, %v1076
    %v1078 = vrot.slane %v1073, %v1077
    %v1079 = vlaneseq
    %v1080 = vshrl.u32 %v1079, 7
    %v1081 = vsub.s32 1, %v1080
    %v1082 = vrot.slane %v1073, %v1081
    %v1149 = vunpack.c.l.b16 %v1009
    %v1150 = vunpack.c.h.b16 %v1009
    %v1151 = vunpack.c.l.b16 %v1010
    %v1152 = vunpack.c.h.b16 %v1010
    %v1153 = vunpack.c.l.b16 %v1011
    %v1154 = vunpack.c.h.b16 %v1011
    %v1155 = vunpack.c.l.b16 %v1012
    %v1156 = vunpack.c.h.b16 %v1012
    %v1157 = vunpack.c.l.b16 %v1013
    %v1158 = vunpack.c.h.b16 %v1013
    %v1159 = vunpack.c.l.b16 %v1014
    %v1160 = vunpack.c.h.b16 %v1014
    %v1161 = vunpack.c.l.b16 %v1015
    %v1162 = vunpack.c.h.b16 %v1015
    %v1163 = vunpack.c.l.b16 %v1016
    %v1164 = vunpack.c.h.b16 %v1016
    %v1165 = vunpack.c.l.b16 %v1017
    %v1166 = vunpack.c.h.b16 %v1017
    %v1167 = vunpack.c.l.b16 %v1018
    %v1168 = vunpack.c.h.b16 %v1018
    %v1169 = vunpack.c.l.b16 %v1019
    %v1170 = vunpack.c.h.b16 %v1019
    %v1171 = vunpack.c.l.b16 %v1020
    %v1172 = vunpack.c.h.b16 %v1020
    %v1173 = vunpack.c.l.b16 %v1021
    %v1174 = vunpack.c.h.b16 %v1021
    %v1175 = vunpack.c.l.b16 %v1022
    %v1176 = vunpack.c.h.b16 %v1022
    %v1177 = vunpack.c.l.b16 %v1023
    %v1178 = vunpack.c.h.b16 %v1023
    %v1179 = vunpack.c.l.b16 %v1024
    %v1180 = vunpack.c.h.b16 %v1024
    %v1181 = vunpack.c.l.b16 %v1025
    %v1182 = vunpack.c.h.b16 %v1025
    %v1183 = vunpack.c.l.b16 %v1026
    %v1184 = vunpack.c.h.b16 %v1026
    %v1185 = vunpack.c.l.b16 %v1027
    %v1186 = vunpack.c.h.b16 %v1027
    %v1187 = vunpack.c.l.b16 %v1028
    %v1188 = vunpack.c.h.b16 %v1028
    %v1189 = vunpack.c.l.b16 %v1029
    %v1190 = vunpack.c.h.b16 %v1029
    %v1191 = vunpack.c.l.b16 %v1030
    %v1192 = vunpack.c.h.b16 %v1030
    %v1193 = vunpack.c.l.b16 %v1031
    %v1194 = vunpack.c.h.b16 %v1031
    %v1195 = vunpack.c.l.b16 %v1032
    %v1196 = vunpack.c.h.b16 %v1032
    %v1197 = vunpack.c.l.b16 %v1033
    %v1198 = vunpack.c.h.b16 %v1033
    %v1199 = vunpack.c.l.b16 %v1034
    %v1200 = vunpack.c.h.b16 %v1034
    %v1201 = vunpack.c.l.b16 %v1035
    %v1202 = vunpack.c.h.b16 %v1035
    %v1203 = vunpack.c.l.b16 %v1036
    %v1204 = vunpack.c.h.b16 %v1036
    %v1205 = vunpack.c.l.b16 %v1037
    %v1206 = vunpack.c.h.b16 %v1037
    %v1207 = vunpack.c.l.b16 %v1038
    %v1208 = vunpack.c.h.b16 %v1038
    %v1209 = vunpack.c.l.b16 %v1039
    %v1210 = vunpack.c.h.b16 %v1039
    %v1211 = vunpack.c.l.b16 %v1040
    %v1212 = vunpack.c.h.b16 %v1040
    %v1213 = vunpack.c.l.b16 %v1041
    %v1214 = vunpack.c.h.b16 %v1041
    %v1215 = vunpack.c.l.b16 %v1042
    %v1216 = vunpack.c.h.b16 %v1042
    %v1217 = vunpack.c.l.b16 %v1043
    %v1218 = vunpack.c.h.b16 %v1043
    %v1219 = vunpack.c.l.b16 %v1044
    %v1220 = vunpack.c.h.b16 %v1044
    %v1221 = vunpack.c.l.b16 %v1045
    %v1222 = vunpack.c.h.b16 %v1045
    %v1223 = vunpack.c.l.b16 %v1046
    %v1224 = vunpack.c.h.b16 %v1046
    %v1225 = vunpack.c.l.b16 %v1047
    %v1226 = vunpack.c.h.b16 %v1047
    %v1227 = vunpack.c.l.b16 %v1048
    %v1228 = vunpack.c.h.b16 %v1048
    %v1229 = vunpack.c.l.b16 %v1049
    %v1230 = vunpack.c.h.b16 %v1049
    %v1231 = vunpack.c.l.b16 %v1050
    %v1232 = vunpack.c.h.b16 %v1050
    %v1233 = vunpack.c.l.b16 %v1051
    %v1234 = vunpack.c.h.b16 %v1051
    %v1235 = vunpack.c.l.b16 %v1052
    %v1236 = vunpack.c.h.b16 %v1052
    %v1237 = vunpack.c.l.b16 %v1053
    %v1238 = vunpack.c.h.b16 %v1053
    %v1239 = vunpack.c.l.b16 %v1054
    %v1240 = vunpack.c.h.b16 %v1054
    %v1241 = vunpack.c.l.b16 %v1055
    %v1242 = vunpack.c.h.b16 %v1055
    %v1243 = vunpack.c.l.b16 %v1056
    %v1244 = vunpack.c.h.b16 %v1056
    %v1245 = vunpack.c.l.b16 %v1057
    %v1246 = vunpack.c.h.b16 %v1057
    %v1247 = vunpack.c.l.b16 %v1058
    %v1248 = vunpack.c.h.b16 %v1058
    %v1249 = vunpack.c.l.b16 %v1059
    %v1250 = vunpack.c.h.b16 %v1059
    %v1251 = vunpack.c.l.b16 %v1060
    %v1252 = vunpack.c.h.b16 %v1060
    %v1253 = vunpack.c.l.b16 %v1061
    %v1254 = vunpack.c.h.b16 %v1061
    %v1255 = vunpack.c.l.b16 %v1062
    %v1256 = vunpack.c.h.b16 %v1062
    %v1257 = vunpack.c.l.b16 %v1063
    %v1258 = vunpack.c.h.b16 %v1063
    %v1259 = vunpack.c.l.b16 %v1064
    %v1260 = vunpack.c.h.b16 %v1064
    %v1261 = vunpack.c.l.b16 %v1065
    %v1262 = vunpack.c.h.b16 %v1065
    %v1263 = vunpack.c.l.b16 %v1066
    %v1264 = vunpack.c.h.b16 %v1066
    %v1265 = vunpack.c.l.b16 %v1067
    %v1266 = vunpack.c.h.b16 %v1067
    %v1267 = vunpack.c.l.b16 %v1068
    %v1268 = vunpack.c.h.b16 %v1068
    %v1269 = vunpack.c.l.b16 %v1069
    %v1270 = vunpack.c.h.b16 %v1069
    %v1271 = vunpack.c.l.b16 %v1070
    %v1272 = vunpack.c.h.b16 %v1070
    %v1273 = vunpack.c.l.b16 %v1071
    %v1274 = vunpack.c.h.b16 %v1071
    %v1275 = vunpack.c.l.b16 %v1072
    %v1276 = vunpack.c.h.b16 %v1072
    %v1277 = vpack.c.b16 %v1151, %v1149
    %v1278 = vpack.c.b16 %v1152, %v1150
    %v1279 = vpack.c.b16 %v1155, %v1153
    %v1280 = vpack.c.b16 %v1156, %v1154
    %v1281 = vpack.c.b16 %v1159, %v1157
    %v1282 = vpack.c.b16 %v1160, %v1158
    %v1283 = vpack.c.b16 %v1163, %v1161
    %v1284 = vpack.c.b16 %v1164, %v1162
    %v1285 = vpack.c.b16 %v1167, %v1165
    %v1286 = vpack.c.b16 %v1168, %v1166
    %v1287 = vpack.c.b16 %v1171, %v1169
    %v1288 = vpack.c.b16 %v1172, %v1170
    %v1289 = vpack.c.b16 %v1175, %v1173
    %v1290 = vpack.c.b16 %v1176, %v1174
    %v1291 = vpack.c.b16 %v1179, %v1177
    %v1292 = vpack.c.b16 %v1180, %v1178
    %v1293 = vpack.c.b16 %v1183, %v1181
    %v1294 = vpack.c.b16 %v1184, %v1182
    %v1295 = vpack.c.b16 %v1187, %v1185
    %v1296 = vpack.c.b16 %v1188, %v1186
    %v1297 = vpack.c.b16 %v1191, %v1189
    %v1298 = vpack.c.b16 %v1192, %v1190
    %v1299 = vpack.c.b16 %v1195, %v1193
    %v1300 = vpack.c.b16 %v1196, %v1194
    %v1301 = vpack.c.b16 %v1199, %v1197
    %v1302 = vpack.c.b16 %v1200, %v1198
    %v1303 = vpack.c.b16 %v1203, %v1201
    %v1304 = vpack.c.b16 %v1204, %v1202
    %v1305 = vpack.c.b16 %v1207, %v1205
    %v1306 = vpack.c.b16 %v1208, %v1206
    %v1307 = vpack.c.b16 %v1211, %v1209
    %v1308 = vpack.c.b16 %v1212, %v1210
    %v1309 = vpack.c.b16 %v1215, %v1213
    %v1310 = vpack.c.b16 %v1216, %v1214
    %v1311 = vpack.c.b16 %v1219, %v1217
    %v1312 = vpack.c.b16 %v1220, %v1218
    %v1313 = vpack.c.b16 %v1223, %v1221
    %v1314 = vpack.c.b16 %v1224, %v1222
    %v1315 = vpack.c.b16 %v1227, %v1225
    %v1316 = vpack.c.b16 %v1228, %v1226
    %v1317 = vpack.c.b16 %v1231, %v1229
    %v1318 = vpack.c.b16 %v1232, %v1230
    %v1319 = vpack.c.b16 %v1235, %v1233
    %v1320 = vpack.c.b16 %v1236, %v1234
    %v1321 = vpack.c.b16 %v1239, %v1237
    %v1322 = vpack.c.b16 %v1240, %v1238
    %v1323 = vpack.c.b16 %v1243, %v1241
    %v1324 = vpack.c.b16 %v1244, %v1242
    %v1325 = vpack.c.b16 %v1247, %v1245
    %v1326 = vpack.c.b16 %v1248, %v1246
    %v1327 = vpack.c.b16 %v1251, %v1249
    %v1328 = vpack.c.b16 %v1252, %v1250
    %v1329 = vpack.c.b16 %v1255, %v1253
    %v1330 = vpack.c.b16 %v1256, %v1254
    %v1331 = vpack.c.b16 %v1259, %v1257
    %v1332 = vpack.c.b16 %v1260, %v1258
    %v1333 = vpack.c.b16 %v1263, %v1261
    %v1334 = vpack.c.b16 %v1264, %v1262
    %v1335 = vpack.c.b16 %v1267, %v1265
    %v1336 = vpack.c.b16 %v1268, %v1266
    %v1337 = vpack.c.b16 %v1271, %v1269
    %v1338 = vpack.c.b16 %v1272, %v1270
    %v1339 = vpack.c.b16 %v1275, %v1273
    %v1340 = vpack.c.b16 %v1276, %v1274
    %1405 = vmatprep.subr.bf16.mxu0 %v1278
    %1406 = vmatpush1.bf16.msra.mxu0 %v1277
    %1407 = vmatprep.subr.bf16.mxu0 %v1280
    %1408 = vmatpush1.bf16.msra.mxu0 %v1279
    %1409 = vmatprep.subr.bf16.mxu0 %v1282
    %1410 = vmatpush1.bf16.msra.mxu0 %v1281
    %1411 = vmatprep.subr.bf16.mxu0 %v1284
    %1412 = vmatpush1.bf16.msra.mxu0 %v1283
    %1413 = vmatprep.subr.bf16.mxu0 %v1286
    %1414 = vmatpush1.bf16.msra.mxu0 %v1285
    %1415 = vmatprep.subr.bf16.mxu0 %v1288
    %1416 = vmatpush1.bf16.msra.mxu0 %v1287
    %1417 = vmatprep.subr.bf16.mxu0 %v1290
    %1418 = vmatpush1.bf16.msra.mxu0 %v1289
    %1419 = vmatprep.subr.bf16.mxu0 %v1292
    %1420 = vmatpush1.bf16.msra.mxu0 %v1291
    %1421 = vmatprep.subr.bf16.mxu0 %v1294
    %1422 = vmatpush1.bf16.msra.mxu0 %v1293
    %1423 = vmatprep.subr.bf16.mxu0 %v1296
    %1424 = vmatpush1.bf16.msra.mxu0 %v1295
    %1425 = vmatprep.subr.bf16.mxu0 %v1298
    %1426 = vmatpush1.bf16.msra.mxu0 %v1297
    %1427 = vmatprep.subr.bf16.mxu0 %v1300
    %1428 = vmatpush1.bf16.msra.mxu0 %v1299
    %1429 = vmatprep.subr.bf16.mxu0 %v1302
    %1430 = vmatpush1.bf16.msra.mxu0 %v1301
    %1431 = vmatprep.subr.bf16.mxu0 %v1304
    %1432 = vmatpush1.bf16.msra.mxu0 %v1303
    %1433 = vmatprep.subr.bf16.mxu0 %v1306
    %1434 = vmatpush1.bf16.msra.mxu0 %v1305
    %1435 = vmatprep.subr.bf16.mxu0 %v1308
    %1436 = vmatpush1.bf16.msra.mxu0 %v1307
    %1437 = vmatprep.mubr.bf16.mxu0 %v1006
    %1438 = vmatmul.mubr.bf16.gmra.mrb[0].mxu0 %v1005
    %v1439 = vpop.f32.mrb[0].mxu0
    %v1440 = vadd.f32 %v1078, %v1439
    %v1441 = vpop.f32.mrb[0].mxu0
    %v1442 = vadd.f32 %v1082, %v1441
    %v1443 = vpop.f32.mrb[0].mxu0
    %v1444 = vpop.f32.mrb[0].mxu0
    %1445 = vdwg.mxu0
    %1446 = vmatprep.subr.bf16.mxu0 %v1310
    %1447 = vmatpush1.bf16.msra.mxu0 %v1309
    %1448 = vmatprep.subr.bf16.mxu0 %v1312
    %1449 = vmatpush1.bf16.msra.mxu0 %v1311
    %1450 = vmatprep.subr.bf16.mxu0 %v1314
    %1451 = vmatpush1.bf16.msra.mxu0 %v1313
    %1452 = vmatprep.subr.bf16.mxu0 %v1316
    %1453 = vmatpush1.bf16.msra.mxu0 %v1315
    %1454 = vmatprep.subr.bf16.mxu0 %v1318
    %1455 = vmatpush1.bf16.msra.mxu0 %v1317
    %1456 = vmatprep.subr.bf16.mxu0 %v1320
    %1457 = vmatpush1.bf16.msra.mxu0 %v1319
    %1458 = vmatprep.subr.bf16.mxu0 %v1322
    %1459 = vmatpush1.bf16.msra.mxu0 %v1321
    %1460 = vmatprep.subr.bf16.mxu0 %v1324
    %1461 = vmatpush1.bf16.msra.mxu0 %v1323
    %1462 = vmatprep.subr.bf16.mxu0 %v1326
    %1463 = vmatpush1.bf16.msra.mxu0 %v1325
    %1464 = vmatprep.subr.bf16.mxu0 %v1328
    %1465 = vmatpush1.bf16.msra.mxu0 %v1327
    %1466 = vmatprep.subr.bf16.mxu0 %v1330
    %1467 = vmatpush1.bf16.msra.mxu0 %v1329
    %1468 = vmatprep.subr.bf16.mxu0 %v1332
    %1469 = vmatpush1.bf16.msra.mxu0 %v1331
    %1470 = vmatprep.subr.bf16.mxu0 %v1334
    %1471 = vmatpush1.bf16.msra.mxu0 %v1333
    %1472 = vmatprep.subr.bf16.mxu0 %v1336
    %1473 = vmatpush1.bf16.msra.mxu0 %v1335
    %1474 = vmatprep.subr.bf16.mxu0 %v1338
    %1475 = vmatpush1.bf16.msra.mxu0 %v1337
    %1476 = vmatprep.subr.bf16.mxu0 %v1340
    %1477 = vmatpush1.bf16.msra.mxu0 %v1339
    %1478 = vmatprep.mubr.bf16.mxu0 %v1008
    %1479 = vmatmul.mubr.bf16.gmra.mrb[0].mxu0 %v1007
    %v1480 = vpop.f32.mrb[0].mxu0
    %v1481 = vadd.f32 %v1440, %v1480
    %v1482 = vpop.f32.mrb[0].mxu0
    %v1483 = vadd.f32 %v1442, %v1482
    %v1484 = vpop.f32.mrb[0].mxu0
    %v1485 = vpop.f32.mrb[0].mxu0
    %1486 = vdwg.mxu0
    %1487 = vset.pattern.permute.xlu0 1
    %1488 = vperm.xlu0 %1487, %v67
    %v1489 = vpop.permute.xlu0 %1488
    %vm1490 = vcmp.eq.s32.totalorder %v69, %v1489
    %v1491 = vsel %vm1490, 1, 0
    %v1492 = vcvt.s32.f32 %v1491
    %vm1493 = vcmp.lt.s32.totalorder %v69, 3
    %v1494 = vsel %vm1493, %v1481, -1e+30
    %1495 = vmax.xlane.f32.xlu0 %v1494
    %v1496 = vpop.xlane.xlu0 %1495
    %v1497 = vsub.f32 %v1494, %v1496
    %v1498 = vmul.f32 %v1497, 1.442695
    %v1499 = vpow.pop %v1498
    %1500 = vadd.xlane.f32.xlu0 %v1499
    %v1501 = vpop.xlane.xlu0 %1500
    %v1502 = vlog2.pop %v1501
    %v1503 = vmul.f32 %v1502, 0.6931472
    %v1504 = vadd.f32 %v1503, %v1496
    %v1505 = vmul.f32 %v1481, %v1492
    %1506 = vadd.xlane.f32.xlu0 %v1505
    %v1507 = vpop.xlane.xlu0 %1506
    %v1508 = vsub.f32 %v1504, %v1507
    %v1509 = vrot.slane %v1508, 4
    %v1510 = vadd.f32 %v1508, %v1509
    %v1511 = vrot.slane %v1510, 2
    %v1512 = vadd.f32 %v1510, %v1511
    %v1513 = vrot.slane %v1512, 1
    %v1514 = vadd.f32 %v1512, %v1513
    %v1515 = vmul.f32 %v1514, 0.125
    %vm1516 = vcmp.ge.f32.partialorder %v1507, %v1496
    %v1517 = vsel %vm1516, 1, 0
    %v1518 = vcvt.s32.f32 %v1517
    %v1519 = vrot.slane %v1518, 4
    %v1520 = vadd.f32 %v1518, %v1519
    %v1521 = vrot.slane %v1520, 2
    %v1522 = vadd.f32 %v1520, %v1521
    %v1523 = vrot.slane %v1522, 1
    %v1524 = vadd.f32 %v1522, %v1523
    %v1525 = vmul.f32 %v1524, 0.125
    %1526 = vset.pattern.permute.xlu0 2
    %1527 = vperm.xlu0 %1526, %v67
    %v1528 = vpop.permute.xlu0 %1527
    %vm1529 = vcmp.eq.s32.totalorder %v69, %v1528
    %v1530 = vsel %vm1529, 1, 0
    %v1531 = vcvt.s32.f32 %v1530
    %vm1532 = vcmp.lt.s32.totalorder %v69, 2
    %v1533 = vsel %vm1532, %v1483, -1e+30
    %1534 = vmax.xlane.f32.xlu0 %v1533
    %v1535 = vpop.xlane.xlu0 %1534
    %v1536 = vsub.f32 %v1533, %v1535
    %v1537 = vmul.f32 %v1536, 1.442695
    %v1538 = vpow.pop %v1537
    %1539 = vadd.xlane.f32.xlu0 %v1538
    %v1540 = vpop.xlane.xlu0 %1539
    %v1541 = vlog2.pop %v1540
    %v1542 = vmul.f32 %v1541, 0.6931472
    %v1543 = vadd.f32 %v1542, %v1535
    %v1544 = vmul.f32 %v1483, %v1531
    %1545 = vadd.xlane.f32.xlu0 %v1544
    %v1546 = vpop.xlane.xlu0 %1545
    %v1547 = vsub.f32 %v1543, %v1546
    %v1548 = vrot.slane %v1547, 4
    %v1549 = vadd.f32 %v1547, %v1548
    %v1550 = vrot.slane %v1549, 2
    %v1551 = vadd.f32 %v1549, %v1550
    %v1552 = vrot.slane %v1551, 1
    %v1553 = vadd.f32 %v1551, %v1552
    %v1554 = vmul.f32 %v1553, 0.125
    %vm1555 = vcmp.ge.f32.partialorder %v1546, %v1535
    %v1556 = vsel %vm1555, 1, 0
    %v1557 = vcvt.s32.f32 %v1556
    %v1558 = vrot.slane %v1557, 4
    %v1559 = vadd.f32 %v1557, %v1558
    %v1560 = vrot.slane %v1559, 2
    %v1561 = vadd.f32 %v1559, %v1560
    %v1562 = vrot.slane %v1561, 1
    %v1563 = vadd.f32 %v1561, %v1562
    %v1564 = vmul.f32 %v1563, 0.125
    %v1565 = vld [vmem:[%s5 + $0x11] sm:$0x1]
    %v1566 = vld [vmem:[%s5 + $0x12] sm:$0x1]
    %v1567 = vld [vmem:[%s5 + $0x13] sm:$0x1]
    %v1569 = vlaneseq
    %v1570 = vshrl.u32 %v1569, 7
    %v1571 = vsub.s32 0, %v1570
    %v1572 = vrot.slane %v1565, %v1571
    %v1574 = vmul.f32 %v222, %v1572
    %1575 = vadd.xlane.f32.xlu0 %v1574
    %v1576 = vpop.xlane.xlu0 %1575
    %v1578 = vlaneseq
    %v1579 = vshrl.u32 %v1578, 7
    %v1580 = vsub.s32 0, %v1579
    %v1581 = vrot.slane %v1566, %v1580
    %v1583 = vmul.f32 %v219, %v1581
    %1584 = vadd.xlane.f32.xlu0 %v1583
    %v1585 = vpop.xlane.xlu0 %1584
    %v1587 = vlaneseq
    %v1588 = vshrl.u32 %v1587, 7
    %v1589 = vsub.s32 0, %v1588
    %v1590 = vrot.slane %v1567, %v1589
    %v1592 = vmul.f32 %v220, %v1590
    %1593 = vadd.xlane.f32.xlu0 %v1592
    %v1594 = vpop.xlane.xlu0 %1593
    %v1595 = vrot.slane %v1576, 4
    %v1596 = vadd.f32 %v1576, %v1595
    %v1597 = vrot.slane %v1596, 2
    %v1598 = vadd.f32 %v1596, %v1597
    %v1599 = vrot.slane %v1598, 1
    %v1600 = vadd.f32 %v1598, %v1599
    %v1601 = vmul.f32 %v1600, %v896
    %v1602 = vrot.slane %v1585, 4
    %v1603 = vadd.f32 %v1585, %v1602
    %v1604 = vrot.slane %v1603, 2
    %v1605 = vadd.f32 %v1603, %v1604
    %v1606 = vrot.slane %v1605, 1
    %v1607 = vadd.f32 %v1605, %v1606
    %v1608 = vmul.f32 %v1607, %v896
    %v1609 = vrot.slane %v1594, 4
    %v1610 = vadd.f32 %v1594, %v1609
    %v1611 = vrot.slane %v1610, 2
    %v1612 = vadd.f32 %v1610, %v1611
    %v1613 = vrot.slane %v1612, 1
    %v1614 = vadd.f32 %v1612, %v1613
    %v1615 = vmul.f32 %v1614, %v896
    %v1616 = vsub.f32 %v1576, %v1601
    %v1617 = vmul.f32 %v1616, %v1616
    %v1618 = vrot.slane %v1617, 4
    %v1619 = vadd.f32 %v1617, %v1618
    %v1620 = vrot.slane %v1619, 2
    %v1621 = vadd.f32 %v1619, %v1620
    %v1622 = vrot.slane %v1621, 1
    %v1623 = vadd.f32 %v1621, %v1622
    %v1624 = vrcp.pop 7.0
    %v1625 = vmul.f32 %v1623, %v1624
    %v1626 = vadd.f32 %v1625, 1e-06
    %v1627 = vsub.f32 %v1585, %v1608
    %v1628 = vmul.f32 %v1627, %v1627
    %v1629 = vrot.slane %v1628, 4
    %v1630 = vadd.f32 %v1628, %v1629
    %v1631 = vrot.slane %v1630, 2
    %v1632 = vadd.f32 %v1630, %v1631
    %v1633 = vrot.slane %v1632, 1
    %v1634 = vadd.f32 %v1632, %v1633
    %v1635 = vmul.f32 %v1634, %v1624
    %v1636 = vadd.f32 %v1635, 1e-06
    %v1637 = vsub.f32 %v1594, %v1615
    %v1638 = vmul.f32 %v1637, %v1637
    %v1639 = vrot.slane %v1638, 4
    %v1640 = vadd.f32 %v1638, %v1639
    %v1641 = vrot.slane %v1640, 2
    %v1642 = vadd.f32 %v1640, %v1641
    %v1643 = vrot.slane %v1642, 1
    %v1644 = vadd.f32 %v1642, %v1643
    %v1645 = vmul.f32 %v1644, %v1624
    %v1646 = vadd.f32 %v1645, 1e-06
    %v1647 = vmul.f32 %v1627, %v1616
    %v1648 = vrot.slane %v1647, 4
    %v1649 = vadd.f32 %v1647, %v1648
    %v1650 = vrot.slane %v1649, 2
    %v1651 = vadd.f32 %v1649, %v1650
    %v1652 = vrot.slane %v1651, 1
    %v1653 = vadd.f32 %v1651, %v1652
    %v1654 = vmul.f32 %v1653, %v896
    %v1655 = vmul.f32 %v1654, %v1654
    %v1656 = vmul.f32 %v1636, %v1626
    %v1657 = vrcp.pop %v1656
    %v1658 = vmul.f32 %v1655, %v1657
    %v1659 = vmul.f32 %v1637, %v1616
    %v1660 = vrot.slane %v1659, 4
    %v1661 = vadd.f32 %v1659, %v1660
    %v1662 = vrot.slane %v1661, 2
    %v1663 = vadd.f32 %v1661, %v1662
    %v1664 = vrot.slane %v1663, 1
    %v1665 = vadd.f32 %v1663, %v1664
    %v1666 = vmul.f32 %v1665, %v896
    %v1667 = vmul.f32 %v1666, %v1666
    %v1668 = vmul.f32 %v1646, %v1626
    %v1669 = vrcp.pop %v1668
    %v1670 = vmul.f32 %v1667, %v1669
    %v1671 = vmul.f32 %v1627, %v1637
    %v1672 = vrot.slane %v1671, 4
    %v1673 = vadd.f32 %v1671, %v1672
    %v1674 = vrot.slane %v1673, 2
    %v1675 = vadd.f32 %v1673, %v1674
    %v1676 = vrot.slane %v1675, 1
    %v1677 = vadd.f32 %v1675, %v1676
    %v1678 = vmul.f32 %v1677, %v896
    %v1679 = vmul.f32 %v1678, %v1678
    %v1680 = vmul.f32 %v1636, %v1646
    %v1681 = vrcp.pop %v1680
    %v1682 = vmul.f32 %v1679, %v1681
    %v1683 = vadd.f32 %v1658, %v1670
    %v1684 = vadd.f32 %v1683, %v1682
    %v1685 = vrcp.pop 3.0
    %v1686 = vmul.f32 %v1684, %v1685
    %vm1687 = vcmp.eq.s32.totalorder %v69, 0
    %v1688 = vsel %vm1687, 1, 0
    %v1689 = vcvt.s32.f32 %v1688
    %v1690 = vmul.f32 %v371, %v1689
    %vm1691 = vcmp.eq.s32.totalorder %v69, 1
    %v1692 = vsel %vm1691, 1, 0
    %v1693 = vcvt.s32.f32 %v1692
    %v1694 = vmul.f32 %v381, %v1693
    %v1695 = vadd.f32 %v1690, %v1694
    %vm1696 = vcmp.eq.s32.totalorder %v69, 2
    %v1697 = vsel %vm1696, 1, 0
    %v1698 = vcvt.s32.f32 %v1697
    %v1699 = vmul.f32 %v1515, %v1698
    %v1700 = vadd.f32 %v1695, %v1699
    %vm1701 = vcmp.eq.s32.totalorder %v69, 3
    %v1702 = vsel %vm1701, 1, 0
    %v1703 = vcvt.s32.f32 %v1702
    %v1704 = vmul.f32 %v1525, %v1703
    %v1705 = vadd.f32 %v1700, %v1704
    %vm1706 = vcmp.eq.s32.totalorder %v69, 4
    %v1707 = vsel %vm1706, 1, 0
    %v1708 = vcvt.s32.f32 %v1707
    %v1709 = vmul.f32 %v1554, %v1708
    %v1710 = vadd.f32 %v1705, %v1709
    %vm1711 = vcmp.eq.s32.totalorder %v69, 5
    %v1712 = vsel %vm1711, 1, 0
    %v1713 = vcvt.s32.f32 %v1712
    %v1714 = vmul.f32 %v1564, %v1713
    %v1715 = vadd.f32 %v1710, %v1714
    %vm1716 = vcmp.eq.s32.totalorder %v69, 6
    %v1717 = vsel %vm1716, 1, 0
    %v1718 = vcvt.s32.f32 %v1717
    %v1719 = vmul.f32 %v1686, %v1718
    %v1720 = vadd.f32 %v1715, %v1719
    %1721 = vst [vmem:[%s6] sm:$0x1] %v1720
    // Predicated region
    $region38: #{multitask_dal_forward.1} parent=1 // pred_check
      _
    $region39: #{multitask_dal_forward.1} parent=1 // pred_check_branch
      %1723 = sbr.rel (0) target = $region41
    $region40: #{multitask_dal_forward.1} parent=1 // pred_region
      _
    $region41: #{multitask_dal_forward.1} parent=1 // pred_fallthru
      _
    // Predicated region
    $region42: #{multitask_dal_forward.1} parent=1 // pred_check
      _
    $region43: #{multitask_dal_forward.1} parent=1 // pred_check_branch
      %1725 = sbr.rel (0) target = $region45
    $region44: #{multitask_dal_forward.1} parent=1 // pred_region
      _
    $region45: #{multitask_dal_forward.1} parent=1 // pred_fallthru
      _
    %1726 = vsyncpa [#allocation3], 1
    %1727 = vsyncpa [#allocation5], 1

</llo_original>
